<compile_context>
chip_gen: v7x
topology: tpu7x:2x2x1
jax: 0.10.0
libtpu: 0.0.40
codegen_flags: <defaults>
</compile_context>

<pallas_src>
import jax
import jax.numpy as jnp
from jax.experimental import pallas as pl
from jax.experimental.pallas import tpu as pltpu


def _lstm_chunk_kernel(x_ref, wih_ref, whh_ref, b_ref, wout_ref, bout_ref,
                       o_ref, h_sc, c_sc, gx_sc, ht_sc):
    """One grid step == one chunk of `tile_t` timesteps of the LSTM recurrence.

    Layouts (time on the 128-lane axis, batch padded to 8 sublanes):
      x_ref   : (I, Bp, tile_t)   input chunk
      wih_ref : (I, 4H)           input->gates weights (pre-transposed)
      whh_ref : (H, 4H)           hidden->gates weights (pre-transposed)
      b_ref   : (1, 4H)           combined bias (b_ih + b_hh)
      wout_ref: (1, H)            final Linear weight (output_size == 1)
      bout_ref: (1, 1)            final Linear bias
      o_ref   : (Bp, tile_t)      output chunk
      h_sc/c_sc: (Bp, H) f32      hidden / cell state carried across chunks
      gx_sc   : (tile_t, Bp, 4H)  staged input projection for this chunk
      ht_sc   : (tile_t, Bp, H)   staged per-step hidden states
    """
    I, Bp, tile_t = x_ref.shape
    H = h_sc.shape[-1]

    @pl.when(pl.program_id(0) == 0)
    def _():
        h_sc[...] = jnp.zeros_like(h_sc)
        c_sc[...] = jnp.zeros_like(c_sc)

    # ---- Input projection for the whole chunk (off the serial path) -------
    # gx[t, b, :] = sum_i x[i, b, t] * Wih[i, :] + bias, staged in VMEM.
    wih = wih_ref[...].astype(jnp.float32)                         # (I, 4H)
    bias = b_ref[...].astype(jnp.float32)                          # (1, 4H)
    if I <= 8:
        # Tiny input_size (module default I=1): VPU broadcast-multiply instead
        # of a degenerate (., I) @ (I, 4H) MXU outer product.
        gx = x_ref[0].T.astype(jnp.float32)[:, :, None] * wih[0:1, :] + bias
        for ii in range(1, I):
            gx = gx + (x_ref[ii].T.astype(jnp.float32)[:, :, None]
                       * wih[ii:ii + 1, :])
    else:
        x_flat = jnp.transpose(x_ref[...], (2, 1, 0)).astype(jnp.float32)
        x_flat = x_flat.reshape(tile_t * Bp, I)
        gx = (jnp.dot(x_flat, wih, preferred_element_type=jnp.float32)
              + bias).reshape(tile_t, Bp, 4 * H)
    gx_sc[...] = gx

    # ---- Hoisted loop constants -------------------------------------------
    whh = whh_ref[...].astype(jnp.float32)                         # (H, 4H)
    lane = jax.lax.broadcasted_iota(jnp.int32, (Bp, 4 * H), 1)
    g_mask = (lane >= 2 * H) & (lane < 3 * H)        # 'g' gate lanes -> tanh
    pre_scale = jnp.where(g_mask, 1.0, 0.5).astype(jnp.float32)

    # ---- Serial recurrence: only h @ W_hh + tanh on the critical path ------
    def step(t, carry):
        h, c = carry
        gates = gx_sc[t] + jnp.dot(h, whh, preferred_element_type=jnp.float32)
        # Single EUP push for all 4 gates: sigmoid(x) = 0.5*tanh(x/2) + 0.5.
        th = jnp.tanh(gates * pre_scale)
        act = jnp.where(g_mask, th, 0.5 * th + 0.5)
        i_g = act[:, 0 * H:1 * H]
        f_g = act[:, 1 * H:2 * H]
        g_g = act[:, 2 * H:3 * H]
        o_g = act[:, 3 * H:4 * H]
        c_new = f_g * c + i_g * g_g
        h_new = o_g * jnp.tanh(c_new)
        ht_sc[t] = h_new          # stage; keeps vreg live ranges short
        return h_new, c_new

    h_fin, c_fin = jax.lax.fori_loop(0, tile_t, step,
                                     (h_sc[...], c_sc[...]),
                                     unroll=min(8, tile_t))
    h_sc[...] = h_fin
    c_sc[...] = c_fin
    # Note: if T was padded, the trailing padded steps keep updating h/c; the
    # padded output rows are sliced off in the wrapper, so the returned output
    # is exact.  TODO(synk): gate padded steps if final (h, c) is ever exposed.

    # ---- Final Linear + bias + skip, once per chunk, lane-dense output -----
    # y[b, t] = ht[t, b, :] . w_out + b_out + x[0, b, t]       (skip == 1)
    y_tb = jnp.sum(ht_sc[...] * wout_ref[...].astype(jnp.float32), axis=-1)
    y_bt = y_tb.T + bout_ref[...] + x_ref[0].astype(jnp.float32)
    o_ref[...] = y_bt.astype(o_ref.dtype)


def rnn_forward(x, w_ih, w_hh, b_ih, b_hh, w_out, b_out, *, tile_t=128):
    """Pallas LSTM (1 layer) + Linear + skip; equals RNN.forward with
    hidden=None, skip == output_size == 1 (module defaults).

    x     : (T, B, I) float32, time-major (torch.nn.LSTM default layout)
    w_ih  : (4H, I)  PyTorch weight_ih_l0
    w_hh  : (4H, H)  PyTorch weight_hh_l0
    b_ih, b_hh : (4H,)
    w_out : (1, H)   lin.weight     b_out : (1,)
    returns (T, B, 1) float32
    """
    T, B, I = x.shape
    H = w_hh.shape[1]
    O = w_out.shape[0]
    assert O == 1, "kernel specialised to output_size == skip == 1"
    # TODO(synk): general output_size / skip>1 needs a per-channel lane layout.

    tile_t = max(8, min(tile_t, T))
    num_chunks = pl.cdiv(T, tile_t)
    T_pad = num_chunks * tile_t
    Bp = max(8, ((B + 7) // 8) * 8)        # pad batch to full sublanes

    xf = jnp.asarray(x, jnp.float32)
    if T_pad != T or Bp != B:
        xf = jnp.pad(xf, ((0, T_pad - T), (0, Bp - B), (0, 0)))
    x_ibt = jnp.transpose(xf, (2, 1, 0))                   # (I, Bp, T_pad)

    wih_t = jnp.asarray(w_ih, jnp.float32).T                   # (I, 4H)
    whh_t = jnp.asarray(w_hh, jnp.float32).T                   # (H, 4H)
    b = (jnp.asarray(b_ih, jnp.float32)
         + jnp.asarray(b_hh, jnp.float32)).reshape(1, 4 * H)   # (1, 4H)
    wout = jnp.asarray(w_out, jnp.float32).reshape(1, H)       # (1, H)
    bout = jnp.asarray(b_out, jnp.float32).reshape(1, 1)       # (1, 1)

    grid_spec = pltpu.PrefetchScalarGridSpec(
        num_scalar_prefetch=0,
        grid=(num_chunks,),
        in_specs=[
            pl.BlockSpec((I, Bp, tile_t), lambda i: (0, 0, i)),
            pl.BlockSpec((I, 4 * H), lambda i: (0, 0)),
            pl.BlockSpec((H, 4 * H), lambda i: (0, 0)),
            pl.BlockSpec((1, 4 * H), lambda i: (0, 0)),
            pl.BlockSpec((1, H), lambda i: (0, 0)),
            pl.BlockSpec((1, 1), lambda i: (0, 0)),
        ],
        out_specs=pl.BlockSpec((Bp, tile_t), lambda i: (0, i)),
        scratch_shapes=[
            pltpu.VMEM((Bp, H), jnp.float32),               # h carry
            pltpu.VMEM((Bp, H), jnp.float32),               # c carry
            pltpu.VMEM((tile_t, Bp, 4 * H), jnp.float32),   # gx staging
            pltpu.VMEM((tile_t, Bp, H), jnp.float32),       # h_t staging
        ],
    )

    out_bt = pl.pallas_call(
        _lstm_chunk_kernel,
        out_shape=jax.ShapeDtypeStruct((Bp, T_pad), jnp.float32),
        grid_spec=grid_spec,
        compiler_params=pltpu.CompilerParams(
            dimension_semantics=("arbitrary",)),   # time recurrence: sequential
    )(x_ibt, wih_t, whh_t, b, wout, bout)

    # Layout plumbing only: back to (T, B, 1).
    return out_bt.T[:T, :B, None]


def rnn_forward_ref(x, w_ih, w_hh, b_ih, b_hh, w_out, b_out):
    """Pure-JAX reference (lax.scan) for correctness checking."""
    T, B, I = x.shape
    H = w_hh.shape[1]
    O = w_out.shape[0]
    b = b_ih + b_hh
    hi = jax.lax.Precision.HIGHEST

    def step(carry, x_t):
        h, c = carry
        gates = (jnp.dot(x_t, w_ih.T, precision=hi)
                 + jnp.dot(h, w_hh.T, precision=hi) + b)
        i = jax.nn.sigmoid(gates[:, 0 * H:1 * H])
        f = jax.nn.sigmoid(gates[:, 1 * H:2 * H])
        g = jnp.tanh(gates[:, 2 * H:3 * H])
        o = jax.nn.sigmoid(gates[:, 3 * H:4 * H])
        c = f * c + i * g
        h = o * jnp.tanh(c)
        y = jnp.dot(h, w_out.T, precision=hi) + b_out + x_t[:, :O]
        return (h, c), y

    init = (jnp.zeros((B, H), jnp.float32), jnp.zeros((B, H), jnp.float32))
    _, ys = jax.lax.scan(step, init, x)
    return ys


if __name__ == "__main__":
    # Module defaults: input_size=1, output_size=1, unit_type='LSTM',
    # hidden_size=32, skip=1, bias_fl=True, nlayers=1.
    T, B, I, H, O = 8, 2, 1, 32, 1

    key = jax.random.PRNGKey(0)
    k = jax.random.split(key, 7)
    bound = 1.0 / jnp.sqrt(float(H))

    # Deterministic init mirroring PyTorch's uniform(-1/sqrt(H), 1/sqrt(H)).
    w_ih = jax.random.uniform(k[0], (4 * H, I), jnp.float32, -bound, bound)
    w_hh = jax.random.uniform(k[1], (4 * H, H), jnp.float32, -bound, bound)
    b_ih = jax.random.uniform(k[2], (4 * H,), jnp.float32, -bound, bound)
    b_hh = jax.random.uniform(k[3], (4 * H,), jnp.float32, -bound, bound)
    w_out = jax.random.uniform(k[4], (O, H), jnp.float32, -bound, bound)
    b_out = jax.random.uniform(k[5], (O,), jnp.float32, -bound, bound)

    x = jax.random.normal(k[6], (T, B, I), jnp.float32)

    out = rnn_forward(x, w_ih, w_hh, b_ih, b_hh, w_out, b_out)
    out = jax.block_until_ready(out)
    ref = rnn_forward_ref(x, w_ih, w_hh, b_ih, b_hh, w_out, b_out)
    assert out.shape == (T, B, O)
    assert jnp.allclose(out, ref, atol=1e-4, rtol=1e-4), \
        float(jnp.max(jnp.abs(out - ref)))

    # Longer sequence: exercises multi-chunk h/c carry plus T and B padding.
    T2, B2 = 300, 3
    x2 = jax.random.normal(jax.random.PRNGKey(1), (T2, B2, I), jnp.float32)
    out2 = jax.block_until_ready(
        rnn_forward(x2, w_ih, w_hh, b_ih, b_hh, w_out, b_out, tile_t=128))
    ref2 = rnn_forward_ref(x2, w_ih, w_hh, b_ih, b_hh, w_out, b_out)
    assert out2.shape == (T2, B2, O)
    assert jnp.allclose(out2, ref2, atol=1e-4, rtol=1e-4), \
        float(jnp.max(jnp.abs(out2 - ref2)))

    print("KERNEL_OK")
</pallas_src>

<mosaic_0001>
module attributes {stable_mosaic.version = 11 : i64} {
  func.func @_lstm_chunk_kernel(%arg0: i32, %arg1: memref<1x8x8xf32, #tpu.memory_space<vmem>>, %arg2: memref<1x128xf32, #tpu.memory_space<vmem>>, %arg3: memref<32x128xf32, #tpu.memory_space<vmem>>, %arg4: memref<1x128xf32, #tpu.memory_space<vmem>>, %arg5: memref<1x32xf32, #tpu.memory_space<vmem>>, %arg6: memref<1x1xf32, #tpu.memory_space<vmem>>, %arg7: memref<8x8xf32, #tpu.memory_space<vmem>>, %arg8: memref<8x32xf32, #tpu.memory_space<vmem>>, %arg9: memref<8x32xf32, #tpu.memory_space<vmem>>, %arg10: memref<8x8x128xf32, #tpu.memory_space<vmem>>, %arg11: memref<8x8x32xf32, #tpu.memory_space<vmem>>) attributes {dimension_semantics = [#tpu.dimension_semantics<arbitrary>], iteration_bounds = array<i64: 1>, scalar_prefetch = 0 : i64, scratch_operands = 4 : i64, tpu.core_type = #tpu.core_type<tc>, window_params = [{transform_indices = @transform_0, window_bounds = array<i64: 1, 8, 8>}, {pipeline_mode = #tpu.pipeline_mode<synchronous>, transform_indices = @transform_1, window_bounds = array<i64: 1, 128>}, {pipeline_mode = #tpu.pipeline_mode<synchronous>, transform_indices = @transform_2, window_bounds = array<i64: 32, 128>}, {pipeline_mode = #tpu.pipeline_mode<synchronous>, transform_indices = @transform_3, window_bounds = array<i64: 1, 128>}, {pipeline_mode = #tpu.pipeline_mode<synchronous>, transform_indices = @transform_4, window_bounds = array<i64: 1, 32>}, {pipeline_mode = #tpu.pipeline_mode<synchronous>, transform_indices = @transform_5, window_bounds = array<i64: 1, 1>}, {transform_indices = @transform_6, window_bounds = array<i64: 8, 8>}]} {
    %c0_i32 = arith.constant 0 : i32
    %0 = arith.cmpi eq, %arg0, %c0_i32 : i32
    %1 = arith.extui %0 : i1 to i32
    %c0_i32_0 = arith.constant 0 : i32
    %2 = arith.cmpi ne, %1, %c0_i32_0 : i32
    scf.if %2 {
      %cst_91 = arith.constant 0.000000e+00 : f32
      %245 = vector.broadcast %cst_91 : f32 to vector<8x32xf32>
      %c0_92 = arith.constant 0 : index
      %c0_93 = arith.constant 0 : index
      %246 = vector.load %arg8[%c0_92, %c0_93] : memref<8x32xf32, #tpu.memory_space<vmem>>, vector<8x32xf32>
      tpu.vector_store %arg8[%c0_92, %c0_93], %245 {strides = array<i32>} : memref<8x32xf32, #tpu.memory_space<vmem>>, vector<8x32xf32>,
      %cst_94 = arith.constant 0.000000e+00 : f32
      %247 = vector.broadcast %cst_94 : f32 to vector<8x32xf32>
      %c0_95 = arith.constant 0 : index
      %c0_96 = arith.constant 0 : index
      %248 = vector.load %arg9[%c0_95, %c0_96] : memref<8x32xf32, #tpu.memory_space<vmem>>, vector<8x32xf32>
      tpu.vector_store %arg9[%c0_95, %c0_96], %247 {strides = array<i32>} : memref<8x32xf32, #tpu.memory_space<vmem>>, vector<8x32xf32>,
    } else {
    }
    %c0 = arith.constant 0 : index
    %c0_1 = arith.constant 0 : index
    %3 = vector.load %arg2[%c0, %c0_1] : memref<1x128xf32, #tpu.memory_space<vmem>>, vector<1x128xf32>
    %c0_2 = arith.constant 0 : index
    %c0_3 = arith.constant 0 : index
    %4 = vector.load %arg4[%c0_2, %c0_3] : memref<1x128xf32, #tpu.memory_space<vmem>>, vector<1x128xf32>
    %c0_4 = arith.constant 0 : index
    %c0_5 = arith.constant 0 : index
    %c0_6 = arith.constant 0 : index
    %5 = vector.load %arg1[%c0_4, %c0_5, %c0_6] : memref<1x8x8xf32, #tpu.memory_space<vmem>>, vector<1x8x8xf32>
    %6 = vector.shape_cast %5 : vector<1x8x8xf32> to vector<8x8xf32>
    %7 = tpu.transpose %6, [1, 0] : vector<8x8xf32> -> vector<8x8xf32>
    %8 = vector.shape_cast %7 : vector<8x8xf32> to vector<8x8x1xf32>
    %9 = vector.shape_cast %3 : vector<1x128xf32> to vector<1x1x128xf32>
    %10 = vector.broadcast %8 : vector<8x8x1xf32> to vector<8x8x128xf32>
    %11 = vector.broadcast %9 : vector<1x1x128xf32> to vector<8x8x128xf32>
    %12 = arith.mulf %10, %11 : vector<8x8x128xf32>
    %13 = vector.shape_cast %4 : vector<1x128xf32> to vector<1x1x128xf32>
    %14 = vector.broadcast %13 : vector<1x1x128xf32> to vector<8x8x128xf32>
    %15 = arith.addf %12, %14 : vector<8x8x128xf32>
    %c0_7 = arith.constant 0 : index
    %c0_8 = arith.constant 0 : index
    %c0_9 = arith.constant 0 : index
    %16 = vector.load %arg10[%c0_7, %c0_8, %c0_9] : memref<8x8x128xf32, #tpu.memory_space<vmem>>, vector<8x8x128xf32>
    tpu.vector_store %arg10[%c0_7, %c0_8, %c0_9], %15 {strides = array<i32>} : memref<8x8x128xf32, #tpu.memory_space<vmem>>, vector<8x8x128xf32>,
    %c0_10 = arith.constant 0 : index
    %c0_11 = arith.constant 0 : index
    %17 = vector.load %arg3[%c0_10, %c0_11] : memref<32x128xf32, #tpu.memory_space<vmem>>, vector<32x128xf32>
    %18 = tpu.iota {dimensions = array<i32: 1>} : vector<8x128xi32>
    %c64_i32 = arith.constant 64 : i32
    %19 = vector.broadcast %c64_i32 : i32 to vector<8x128xi32>
    %20 = arith.cmpi sge, %18, %19 : vector<8x128xi32>
    %c96_i32 = arith.constant 96 : i32
    %21 = vector.broadcast %c96_i32 : i32 to vector<8x128xi32>
    %22 = arith.cmpi slt, %18, %21 : vector<8x128xi32>
    %23 = arith.andi %20, %22 : vector<8x128xi1>
    %cst = arith.constant 1.000000e+00 : f32
    %cst_12 = arith.constant 5.000000e-01 : f32
    %24 = vector.broadcast %cst : f32 to vector<8x128xf32>
    %25 = vector.broadcast %cst_12 : f32 to vector<8x128xf32>
    %26 = arith.select %23, %24, %25 : vector<8x128xi1>, vector<8x128xf32>
    %c0_13 = arith.constant 0 : index
    %c0_14 = arith.constant 0 : index
    %27 = vector.load %arg8[%c0_13, %c0_14] : memref<8x32xf32, #tpu.memory_space<vmem>>, vector<8x32xf32>
    %c0_15 = arith.constant 0 : index
    %c0_16 = arith.constant 0 : index
    %28 = vector.load %arg9[%c0_15, %c0_16] : memref<8x32xf32, #tpu.memory_space<vmem>>, vector<8x32xf32>
    %c0_i32_17 = arith.constant 0 : i32
    %29 = arith.index_cast %c0_i32_17 : i32 to index
    %c0_18 = arith.constant 0 : index
    %c0_19 = arith.constant 0 : index
    %30 = vector.load %arg10[%29, %c0_18, %c0_19] : memref<8x8x128xf32, #tpu.memory_space<vmem>>, vector<1x8x128xf32>
    %31 = vector.shape_cast %30 : vector<1x8x128xf32> to vector<8x128xf32>
    %cst_20 = arith.constant dense<0.000000e+00> : vector<8x128xf32>
    %32 = tpu.matmul %27, %17, %cst_20 {dimension_numbers = #tpu.dot_dimension_numbers<[1], [0], [0], [1], [0, 0, 1, 1], [], []>} : vector<8x32xf32>, vector<32x128xf32>, vector<8x128xf32> -> vector<8x128xf32>
    %33 = arith.addf %31, %32 : vector<8x128xf32>
    %34 = arith.mulf %33, %26 : vector<8x128xf32>
    %35 = math.tanh %34 : vector<8x128xf32>
    %cst_21 = arith.constant 5.000000e-01 : f32
    %36 = vector.broadcast %cst_21 : f32 to vector<8x128xf32>
    %37 = arith.mulf %36, %35 : vector<8x128xf32>
    %cst_22 = arith.constant 5.000000e-01 : f32
    %38 = vector.broadcast %cst_22 : f32 to vector<8x128xf32>
    %39 = arith.addf %37, %38 : vector<8x128xf32>
    %40 = arith.select %23, %35, %39 : vector<8x128xi1>, vector<8x128xf32>
    %41 = vector.extract_strided_slice %40 {offsets = [0, 0], sizes = [8, 32], strides = [1, 1]} : vector<8x128xf32> to vector<8x32xf32>
    %42 = vector.extract_strided_slice %40 {offsets = [0, 32], sizes = [8, 32], strides = [1, 1]} : vector<8x128xf32> to vector<8x32xf32>
    %43 = vector.extract_strided_slice %40 {offsets = [0, 64], sizes = [8, 32], strides = [1, 1]} : vector<8x128xf32> to vector<8x32xf32>
    %44 = vector.extract_strided_slice %40 {offsets = [0, 96], sizes = [8, 32], strides = [1, 1]} : vector<8x128xf32> to vector<8x32xf32>
    %45 = arith.mulf %42, %28 : vector<8x32xf32>
    %46 = arith.mulf %41, %43 : vector<8x32xf32>
    %47 = arith.addf %45, %46 : vector<8x32xf32>
    %48 = math.tanh %47 : vector<8x32xf32>
    %49 = arith.mulf %44, %48 : vector<8x32xf32>
    %50 = arith.index_cast %c0_i32_17 : i32 to index
    %c0_23 = arith.constant 0 : index
    %c0_24 = arith.constant 0 : index
    %51 = vector.load %arg11[%50, %c0_23, %c0_24] : memref<8x8x32xf32, #tpu.memory_space<vmem>>, vector<1x8x32xf32>
    %52 = vector.shape_cast %51 : vector<1x8x32xf32> to vector<8x32xf32>
    %53 = vector.shape_cast %49 : vector<8x32xf32> to vector<1x8x32xf32>
    tpu.vector_store %arg11[%50, %c0_23, %c0_24], %53 {strides = array<i32>} : memref<8x8x32xf32, #tpu.memory_space<vmem>>, vector<1x8x32xf32>,
    %c1_i32 = arith.constant 1 : i32
    %54 = arith.index_cast %c1_i32 : i32 to index
    %c0_25 = arith.constant 0 : index
    %c0_26 = arith.constant 0 : index
    %55 = vector.load %arg10[%54, %c0_25, %c0_26] : memref<8x8x128xf32, #tpu.memory_space<vmem>>, vector<1x8x128xf32>
    %56 = vector.shape_cast %55 : vector<1x8x128xf32> to vector<8x128xf32>
    %cst_27 = arith.constant dense<0.000000e+00> : vector<8x128xf32>
    %57 = tpu.matmul %49, %17, %cst_27 {dimension_numbers = #tpu.dot_dimension_numbers<[1], [0], [0], [1], [0, 0, 1, 1], [], []>} : vector<8x32xf32>, vector<32x128xf32>, vector<8x128xf32> -> vector<8x128xf32>
    %58 = arith.addf %56, %57 : vector<8x128xf32>
    %59 = arith.mulf %58, %26 : vector<8x128xf32>
    %60 = math.tanh %59 : vector<8x128xf32>
    %cst_28 = arith.constant 5.000000e-01 : f32
    %61 = vector.broadcast %cst_28 : f32 to vector<8x128xf32>
    %62 = arith.mulf %61, %60 : vector<8x128xf32>
    %cst_29 = arith.constant 5.000000e-01 : f32
    %63 = vector.broadcast %cst_29 : f32 to vector<8x128xf32>
    %64 = arith.addf %62, %63 : vector<8x128xf32>
    %65 = arith.select %23, %60, %64 : vector<8x128xi1>, vector<8x128xf32>
    %66 = vector.extract_strided_slice %65 {offsets = [0, 0], sizes = [8, 32], strides = [1, 1]} : vector<8x128xf32> to vector<8x32xf32>
    %67 = vector.extract_strided_slice %65 {offsets = [0, 32], sizes = [8, 32], strides = [1, 1]} : vector<8x128xf32> to vector<8x32xf32>
    %68 = vector.extract_strided_slice %65 {offsets = [0, 64], sizes = [8, 32], strides = [1, 1]} : vector<8x128xf32> to vector<8x32xf32>
    %69 = vector.extract_strided_slice %65 {offsets = [0, 96], sizes = [8, 32], strides = [1, 1]} : vector<8x128xf32> to vector<8x32xf32>
    %70 = arith.mulf %67, %47 : vector<8x32xf32>
    %71 = arith.mulf %66, %68 : vector<8x32xf32>
    %72 = arith.addf %70, %71 : vector<8x32xf32>
    %73 = math.tanh %72 : vector<8x32xf32>
    %74 = arith.mulf %69, %73 : vector<8x32xf32>
    %75 = arith.index_cast %c1_i32 : i32 to index
    %c0_30 = arith.constant 0 : index
    %c0_31 = arith.constant 0 : index
    %76 = vector.load %arg11[%75, %c0_30, %c0_31] : memref<8x8x32xf32, #tpu.memory_space<vmem>>, vector<1x8x32xf32>
    %77 = vector.shape_cast %76 : vector<1x8x32xf32> to vector<8x32xf32>
    %78 = vector.shape_cast %74 : vector<8x32xf32> to vector<1x8x32xf32>
    tpu.vector_store %arg11[%75, %c0_30, %c0_31], %78 {strides = array<i32>} : memref<8x8x32xf32, #tpu.memory_space<vmem>>, vector<1x8x32xf32>,
    %c2_i32 = arith.constant 2 : i32
    %79 = arith.index_cast %c2_i32 : i32 to index
    %c0_32 = arith.constant 0 : index
    %c0_33 = arith.constant 0 : index
    %80 = vector.load %arg10[%79, %c0_32, %c0_33] : memref<8x8x128xf32, #tpu.memory_space<vmem>>, vector<1x8x128xf32>
    %81 = vector.shape_cast %80 : vector<1x8x128xf32> to vector<8x128xf32>
    %cst_34 = arith.constant dense<0.000000e+00> : vector<8x128xf32>
    %82 = tpu.matmul %74, %17, %cst_34 {dimension_numbers = #tpu.dot_dimension_numbers<[1], [0], [0], [1], [0, 0, 1, 1], [], []>} : vector<8x32xf32>, vector<32x128xf32>, vector<8x128xf32> -> vector<8x128xf32>
    %83 = arith.addf %81, %82 : vector<8x128xf32>
    %84 = arith.mulf %83, %26 : vector<8x128xf32>
    %85 = math.tanh %84 : vector<8x128xf32>
    %cst_35 = arith.constant 5.000000e-01 : f32
    %86 = vector.broadcast %cst_35 : f32 to vector<8x128xf32>
    %87 = arith.mulf %86, %85 : vector<8x128xf32>
    %cst_36 = arith.constant 5.000000e-01 : f32
    %88 = vector.broadcast %cst_36 : f32 to vector<8x128xf32>
    %89 = arith.addf %87, %88 : vector<8x128xf32>
    %90 = arith.select %23, %85, %89 : vector<8x128xi1>, vector<8x128xf32>
    %91 = vector.extract_strided_slice %90 {offsets = [0, 0], sizes = [8, 32], strides = [1, 1]} : vector<8x128xf32> to vector<8x32xf32>
    %92 = vector.extract_strided_slice %90 {offsets = [0, 32], sizes = [8, 32], strides = [1, 1]} : vector<8x128xf32> to vector<8x32xf32>
    %93 = vector.extract_strided_slice %90 {offsets = [0, 64], sizes = [8, 32], strides = [1, 1]} : vector<8x128xf32> to vector<8x32xf32>
    %94 = vector.extract_strided_slice %90 {offsets = [0, 96], sizes = [8, 32], strides = [1, 1]} : vector<8x128xf32> to vector<8x32xf32>
    %95 = arith.mulf %92, %72 : vector<8x32xf32>
    %96 = arith.mulf %91, %93 : vector<8x32xf32>
    %97 = arith.addf %95, %96 : vector<8x32xf32>
    %98 = math.tanh %97 : vector<8x32xf32>
    %99 = arith.mulf %94, %98 : vector<8x32xf32>
    %100 = arith.index_cast %c2_i32 : i32 to index
    %c0_37 = arith.constant 0 : index
    %c0_38 = arith.constant 0 : index
    %101 = vector.load %arg11[%100, %c0_37, %c0_38] : memref<8x8x32xf32, #tpu.memory_space<vmem>>, vector<1x8x32xf32>
    %102 = vector.shape_cast %101 : vector<1x8x32xf32> to vector<8x32xf32>
    %103 = vector.shape_cast %99 : vector<8x32xf32> to vector<1x8x32xf32>
    tpu.vector_store %arg11[%100, %c0_37, %c0_38], %103 {strides = array<i32>} : memref<8x8x32xf32, #tpu.memory_space<vmem>>, vector<1x8x32xf32>,
    %c3_i32 = arith.constant 3 : i32
    %104 = arith.index_cast %c3_i32 : i32 to index
    %c0_39 = arith.constant 0 : index
    %c0_40 = arith.constant 0 : index
    %105 = vector.load %arg10[%104, %c0_39, %c0_40] : memref<8x8x128xf32, #tpu.memory_space<vmem>>, vector<1x8x128xf32>
    %106 = vector.shape_cast %105 : vector<1x8x128xf32> to vector<8x128xf32>
    %cst_41 = arith.constant dense<0.000000e+00> : vector<8x128xf32>
    %107 = tpu.matmul %99, %17, %cst_41 {dimension_numbers = #tpu.dot_dimension_numbers<[1], [0], [0], [1], [0, 0, 1, 1], [], []>} : vector<8x32xf32>, vector<32x128xf32>, vector<8x128xf32> -> vector<8x128xf32>
    %108 = arith.addf %106, %107 : vector<8x128xf32>
    %109 = arith.mulf %108, %26 : vector<8x128xf32>
    %110 = math.tanh %109 : vector<8x128xf32>
    %cst_42 = arith.constant 5.000000e-01 : f32
    %111 = vector.broadcast %cst_42 : f32 to vector<8x128xf32>
    %112 = arith.mulf %111, %110 : vector<8x128xf32>
    %cst_43 = arith.constant 5.000000e-01 : f32
    %113 = vector.broadcast %cst_43 : f32 to vector<8x128xf32>
    %114 = arith.addf %112, %113 : vector<8x128xf32>
    %115 = arith.select %23, %110, %114 : vector<8x128xi1>, vector<8x128xf32>
    %116 = vector.extract_strided_slice %115 {offsets = [0, 0], sizes = [8, 32], strides = [1, 1]} : vector<8x128xf32> to vector<8x32xf32>
    %117 = vector.extract_strided_slice %115 {offsets = [0, 32], sizes = [8, 32], strides = [1, 1]} : vector<8x128xf32> to vector<8x32xf32>
    %118 = vector.extract_strided_slice %115 {offsets = [0, 64], sizes = [8, 32], strides = [1, 1]} : vector<8x128xf32> to vector<8x32xf32>
    %119 = vector.extract_strided_slice %115 {offsets = [0, 96], sizes = [8, 32], strides = [1, 1]} : vector<8x128xf32> to vector<8x32xf32>
    %120 = arith.mulf %117, %97 : vector<8x32xf32>
    %121 = arith.mulf %116, %118 : vector<8x32xf32>
    %122 = arith.addf %120, %121 : vector<8x32xf32>
    %123 = math.tanh %122 : vector<8x32xf32>
    %124 = arith.mulf %119, %123 : vector<8x32xf32>
    %125 = arith.index_cast %c3_i32 : i32 to index
    %c0_44 = arith.constant 0 : index
    %c0_45 = arith.constant 0 : index
    %126 = vector.load %arg11[%125, %c0_44, %c0_45] : memref<8x8x32xf32, #tpu.memory_space<vmem>>, vector<1x8x32xf32>
    %127 = vector.shape_cast %126 : vector<1x8x32xf32> to vector<8x32xf32>
    %128 = vector.shape_cast %124 : vector<8x32xf32> to vector<1x8x32xf32>
    tpu.vector_store %arg11[%125, %c0_44, %c0_45], %128 {strides = array<i32>} : memref<8x8x32xf32, #tpu.memory_space<vmem>>, vector<1x8x32xf32>,
    %c4_i32 = arith.constant 4 : i32
    %129 = arith.index_cast %c4_i32 : i32 to index
    %c0_46 = arith.constant 0 : index
    %c0_47 = arith.constant 0 : index
    %130 = vector.load %arg10[%129, %c0_46, %c0_47] : memref<8x8x128xf32, #tpu.memory_space<vmem>>, vector<1x8x128xf32>
    %131 = vector.shape_cast %130 : vector<1x8x128xf32> to vector<8x128xf32>
    %cst_48 = arith.constant dense<0.000000e+00> : vector<8x128xf32>
    %132 = tpu.matmul %124, %17, %cst_48 {dimension_numbers = #tpu.dot_dimension_numbers<[1], [0], [0], [1], [0, 0, 1, 1], [], []>} : vector<8x32xf32>, vector<32x128xf32>, vector<8x128xf32> -> vector<8x128xf32>
    %133 = arith.addf %131, %132 : vector<8x128xf32>
    %134 = arith.mulf %133, %26 : vector<8x128xf32>
    %135 = math.tanh %134 : vector<8x128xf32>
    %cst_49 = arith.constant 5.000000e-01 : f32
    %136 = vector.broadcast %cst_49 : f32 to vector<8x128xf32>
    %137 = arith.mulf %136, %135 : vector<8x128xf32>
    %cst_50 = arith.constant 5.000000e-01 : f32
    %138 = vector.broadcast %cst_50 : f32 to vector<8x128xf32>
    %139 = arith.addf %137, %138 : vector<8x128xf32>
    %140 = arith.select %23, %135, %139 : vector<8x128xi1>, vector<8x128xf32>
    %141 = vector.extract_strided_slice %140 {offsets = [0, 0], sizes = [8, 32], strides = [1, 1]} : vector<8x128xf32> to vector<8x32xf32>
    %142 = vector.extract_strided_slice %140 {offsets = [0, 32], sizes = [8, 32], strides = [1, 1]} : vector<8x128xf32> to vector<8x32xf32>
    %143 = vector.extract_strided_slice %140 {offsets = [0, 64], sizes = [8, 32], strides = [1, 1]} : vector<8x128xf32> to vector<8x32xf32>
    %144 = vector.extract_strided_slice %140 {offsets = [0, 96], sizes = [8, 32], strides = [1, 1]} : vector<8x128xf32> to vector<8x32xf32>
    %145 = arith.mulf %142, %122 : vector<8x32xf32>
    %146 = arith.mulf %141, %143 : vector<8x32xf32>
    %147 = arith.addf %145, %146 : vector<8x32xf32>
    %148 = math.tanh %147 : vector<8x32xf32>
    %149 = arith.mulf %144, %148 : vector<8x32xf32>
    %150 = arith.index_cast %c4_i32 : i32 to index
    %c0_51 = arith.constant 0 : index
    %c0_52 = arith.constant 0 : index
    %151 = vector.load %arg11[%150, %c0_51, %c0_52] : memref<8x8x32xf32, #tpu.memory_space<vmem>>, vector<1x8x32xf32>
    %152 = vector.shape_cast %151 : vector<1x8x32xf32> to vector<8x32xf32>
    %153 = vector.shape_cast %149 : vector<8x32xf32> to vector<1x8x32xf32>
    tpu.vector_store %arg11[%150, %c0_51, %c0_52], %153 {strides = array<i32>} : memref<8x8x32xf32, #tpu.memory_space<vmem>>, vector<1x8x32xf32>,
    %c5_i32 = arith.constant 5 : i32
    %154 = arith.index_cast %c5_i32 : i32 to index
    %c0_53 = arith.constant 0 : index
    %c0_54 = arith.constant 0 : index
    %155 = vector.load %arg10[%154, %c0_53, %c0_54] : memref<8x8x128xf32, #tpu.memory_space<vmem>>, vector<1x8x128xf32>
    %156 = vector.shape_cast %155 : vector<1x8x128xf32> to vector<8x128xf32>
    %cst_55 = arith.constant dense<0.000000e+00> : vector<8x128xf32>
    %157 = tpu.matmul %149, %17, %cst_55 {dimension_numbers = #tpu.dot_dimension_numbers<[1], [0], [0], [1], [0, 0, 1, 1], [], []>} : vector<8x32xf32>, vector<32x128xf32>, vector<8x128xf32> -> vector<8x128xf32>
    %158 = arith.addf %156, %157 : vector<8x128xf32>
    %159 = arith.mulf %158, %26 : vector<8x128xf32>
    %160 = math.tanh %159 : vector<8x128xf32>
    %cst_56 = arith.constant 5.000000e-01 : f32
    %161 = vector.broadcast %cst_56 : f32 to vector<8x128xf32>
    %162 = arith.mulf %161, %160 : vector<8x128xf32>
    %cst_57 = arith.constant 5.000000e-01 : f32
    %163 = vector.broadcast %cst_57 : f32 to vector<8x128xf32>
    %164 = arith.addf %162, %163 : vector<8x128xf32>
    %165 = arith.select %23, %160, %164 : vector<8x128xi1>, vector<8x128xf32>
    %166 = vector.extract_strided_slice %165 {offsets = [0, 0], sizes = [8, 32], strides = [1, 1]} : vector<8x128xf32> to vector<8x32xf32>
    %167 = vector.extract_strided_slice %165 {offsets = [0, 32], sizes = [8, 32], strides = [1, 1]} : vector<8x128xf32> to vector<8x32xf32>
    %168 = vector.extract_strided_slice %165 {offsets = [0, 64], sizes = [8, 32], strides = [1, 1]} : vector<8x128xf32> to vector<8x32xf32>
    %169 = vector.extract_strided_slice %165 {offsets = [0, 96], sizes = [8, 32], strides = [1, 1]} : vector<8x128xf32> to vector<8x32xf32>
    %170 = arith.mulf %167, %147 : vector<8x32xf32>
    %171 = arith.mulf %166, %168 : vector<8x32xf32>
    %172 = arith.addf %170, %171 : vector<8x32xf32>
    %173 = math.tanh %172 : vector<8x32xf32>
    %174 = arith.mulf %169, %173 : vector<8x32xf32>
    %175 = arith.index_cast %c5_i32 : i32 to index
    %c0_58 = arith.constant 0 : index
    %c0_59 = arith.constant 0 : index
    %176 = vector.load %arg11[%175, %c0_58, %c0_59] : memref<8x8x32xf32, #tpu.memory_space<vmem>>, vector<1x8x32xf32>
    %177 = vector.shape_cast %176 : vector<1x8x32xf32> to vector<8x32xf32>
    %178 = vector.shape_cast %174 : vector<8x32xf32> to vector<1x8x32xf32>
    tpu.vector_store %arg11[%175, %c0_58, %c0_59], %178 {strides = array<i32>} : memref<8x8x32xf32, #tpu.memory_space<vmem>>, vector<1x8x32xf32>,
    %c6_i32 = arith.constant 6 : i32
    %179 = arith.index_cast %c6_i32 : i32 to index
    %c0_60 = arith.constant 0 : index
    %c0_61 = arith.constant 0 : index
    %180 = vector.load %arg10[%179, %c0_60, %c0_61] : memref<8x8x128xf32, #tpu.memory_space<vmem>>, vector<1x8x128xf32>
    %181 = vector.shape_cast %180 : vector<1x8x128xf32> to vector<8x128xf32>
    %cst_62 = arith.constant dense<0.000000e+00> : vector<8x128xf32>
    %182 = tpu.matmul %174, %17, %cst_62 {dimension_numbers = #tpu.dot_dimension_numbers<[1], [0], [0], [1], [0, 0, 1, 1], [], []>} : vector<8x32xf32>, vector<32x128xf32>, vector<8x128xf32> -> vector<8x128xf32>
    %183 = arith.addf %181, %182 : vector<8x128xf32>
    %184 = arith.mulf %183, %26 : vector<8x128xf32>
    %185 = math.tanh %184 : vector<8x128xf32>
    %cst_63 = arith.constant 5.000000e-01 : f32
    %186 = vector.broadcast %cst_63 : f32 to vector<8x128xf32>
    %187 = arith.mulf %186, %185 : vector<8x128xf32>
    %cst_64 = arith.constant 5.000000e-01 : f32
    %188 = vector.broadcast %cst_64 : f32 to vector<8x128xf32>
    %189 = arith.addf %187, %188 : vector<8x128xf32>
    %190 = arith.select %23, %185, %189 : vector<8x128xi1>, vector<8x128xf32>
    %191 = vector.extract_strided_slice %190 {offsets = [0, 0], sizes = [8, 32], strides = [1, 1]} : vector<8x128xf32> to vector<8x32xf32>
    %192 = vector.extract_strided_slice %190 {offsets = [0, 32], sizes = [8, 32], strides = [1, 1]} : vector<8x128xf32> to vector<8x32xf32>
    %193 = vector.extract_strided_slice %190 {offsets = [0, 64], sizes = [8, 32], strides = [1, 1]} : vector<8x128xf32> to vector<8x32xf32>
    %194 = vector.extract_strided_slice %190 {offsets = [0, 96], sizes = [8, 32], strides = [1, 1]} : vector<8x128xf32> to vector<8x32xf32>
    %195 = arith.mulf %192, %172 : vector<8x32xf32>
    %196 = arith.mulf %191, %193 : vector<8x32xf32>
    %197 = arith.addf %195, %196 : vector<8x32xf32>
    %198 = math.tanh %197 : vector<8x32xf32>
    %199 = arith.mulf %194, %198 : vector<8x32xf32>
    %200 = arith.index_cast %c6_i32 : i32 to index
    %c0_65 = arith.constant 0 : index
    %c0_66 = arith.constant 0 : index
    %201 = vector.load %arg11[%200, %c0_65, %c0_66] : memref<8x8x32xf32, #tpu.memory_space<vmem>>, vector<1x8x32xf32>
    %202 = vector.shape_cast %201 : vector<1x8x32xf32> to vector<8x32xf32>
    %203 = vector.shape_cast %199 : vector<8x32xf32> to vector<1x8x32xf32>
    tpu.vector_store %arg11[%200, %c0_65, %c0_66], %203 {strides = array<i32>} : memref<8x8x32xf32, #tpu.memory_space<vmem>>, vector<1x8x32xf32>,
    %c7_i32 = arith.constant 7 : i32
    %204 = arith.index_cast %c7_i32 : i32 to index
    %c0_67 = arith.constant 0 : index
    %c0_68 = arith.constant 0 : index
    %205 = vector.load %arg10[%204, %c0_67, %c0_68] : memref<8x8x128xf32, #tpu.memory_space<vmem>>, vector<1x8x128xf32>
    %206 = vector.shape_cast %205 : vector<1x8x128xf32> to vector<8x128xf32>
    %cst_69 = arith.constant dense<0.000000e+00> : vector<8x128xf32>
    %207 = tpu.matmul %199, %17, %cst_69 {dimension_numbers = #tpu.dot_dimension_numbers<[1], [0], [0], [1], [0, 0, 1, 1], [], []>} : vector<8x32xf32>, vector<32x128xf32>, vector<8x128xf32> -> vector<8x128xf32>
    %208 = arith.addf %206, %207 : vector<8x128xf32>
    %209 = arith.mulf %208, %26 : vector<8x128xf32>
    %210 = math.tanh %209 : vector<8x128xf32>
    %cst_70 = arith.constant 5.000000e-01 : f32
    %211 = vector.broadcast %cst_70 : f32 to vector<8x128xf32>
    %212 = arith.mulf %211, %210 : vector<8x128xf32>
    %cst_71 = arith.constant 5.000000e-01 : f32
    %213 = vector.broadcast %cst_71 : f32 to vector<8x128xf32>
    %214 = arith.addf %212, %213 : vector<8x128xf32>
    %215 = arith.select %23, %210, %214 : vector<8x128xi1>, vector<8x128xf32>
    %216 = vector.extract_strided_slice %215 {offsets = [0, 0], sizes = [8, 32], strides = [1, 1]} : vector<8x128xf32> to vector<8x32xf32>
    %217 = vector.extract_strided_slice %215 {offsets = [0, 32], sizes = [8, 32], strides = [1, 1]} : vector<8x128xf32> to vector<8x32xf32>
    %218 = vector.extract_strided_slice %215 {offsets = [0, 64], sizes = [8, 32], strides = [1, 1]} : vector<8x128xf32> to vector<8x32xf32>
    %219 = vector.extract_strided_slice %215 {offsets = [0, 96], sizes = [8, 32], strides = [1, 1]} : vector<8x128xf32> to vector<8x32xf32>
    %220 = arith.mulf %217, %197 : vector<8x32xf32>
    %221 = arith.mulf %216, %218 : vector<8x32xf32>
    %222 = arith.addf %220, %221 : vector<8x32xf32>
    %223 = math.tanh %222 : vector<8x32xf32>
    %224 = arith.mulf %219, %223 : vector<8x32xf32>
    %225 = arith.index_cast %c7_i32 : i32 to index
    %c0_72 = arith.constant 0 : index
    %c0_73 = arith.constant 0 : index
    %226 = vector.load %arg11[%225, %c0_72, %c0_73] : memref<8x8x32xf32, #tpu.memory_space<vmem>>, vector<1x8x32xf32>
    %227 = vector.shape_cast %226 : vector<1x8x32xf32> to vector<8x32xf32>
    %228 = vector.shape_cast %224 : vector<8x32xf32> to vector<1x8x32xf32>
    tpu.vector_store %arg11[%225, %c0_72, %c0_73], %228 {strides = array<i32>} : memref<8x8x32xf32, #tpu.memory_space<vmem>>, vector<1x8x32xf32>,
    %c8_i32 = arith.constant 8 : i32
    %c0_74 = arith.constant 0 : index
    %c0_75 = arith.constant 0 : index
    %229 = vector.load %arg8[%c0_74, %c0_75] : memref<8x32xf32, #tpu.memory_space<vmem>>, vector<8x32xf32>
    tpu.vector_store %arg8[%c0_74, %c0_75], %224 {strides = array<i32>} : memref<8x32xf32, #tpu.memory_space<vmem>>, vector<8x32xf32>,
    %c0_76 = arith.constant 0 : index
    %c0_77 = arith.constant 0 : index
    %230 = vector.load %arg9[%c0_76, %c0_77] : memref<8x32xf32, #tpu.memory_space<vmem>>, vector<8x32xf32>
    tpu.vector_store %arg9[%c0_76, %c0_77], %222 {strides = array<i32>} : memref<8x32xf32, #tpu.memory_space<vmem>>, vector<8x32xf32>,
    %c0_78 = arith.constant 0 : index
    %c0_79 = arith.constant 0 : index
    %c0_80 = arith.constant 0 : index
    %231 = vector.load %arg11[%c0_78, %c0_79, %c0_80] : memref<8x8x32xf32, #tpu.memory_space<vmem>>, vector<8x8x32xf32>
    %c0_81 = arith.constant 0 : index
    %c0_82 = arith.constant 0 : index
    %232 = vector.load %arg5[%c0_81, %c0_82] : memref<1x32xf32, #tpu.memory_space<vmem>>, vector<1x32xf32>
    %233 = vector.shape_cast %232 : vector<1x32xf32> to vector<1x1x32xf32>
    %234 = vector.broadcast %233 : vector<1x1x32xf32> to vector<8x8x32xf32>
    %235 = arith.mulf %231, %234 : vector<8x8x32xf32>
    %cst_83 = arith.constant dense<0.000000e+00> : vector<8x8xf32>
    %236 = vector.multi_reduction <add>, %235, %cst_83 [2] : vector<8x8x32xf32> to vector<8x8xf32>
    %237 = tpu.transpose %236, [1, 0] : vector<8x8xf32> -> vector<8x8xf32>
    %c0_84 = arith.constant 0 : index
    %c0_85 = arith.constant 0 : index
    %238 = vector.load %arg6[%c0_84, %c0_85] : memref<1x1xf32, #tpu.memory_space<vmem>>, vector<1x1xf32>
    %239 = vector.broadcast %238 : vector<1x1xf32> to vector<8x8xf32>
    %240 = arith.addf %237, %239 : vector<8x8xf32>
    %c0_86 = arith.constant 0 : index
    %c0_87 = arith.constant 0 : index
    %c0_88 = arith.constant 0 : index
    %241 = vector.load %arg1[%c0_86, %c0_87, %c0_88] : memref<1x8x8xf32, #tpu.memory_space<vmem>>, vector<1x8x8xf32>
    %242 = vector.shape_cast %241 : vector<1x8x8xf32> to vector<8x8xf32>
    %243 = arith.addf %240, %242 : vector<8x8xf32>
    %c0_89 = arith.constant 0 : index
    %c0_90 = arith.constant 0 : index
    %244 = vector.load %arg7[%c0_89, %c0_90] : memref<8x8xf32, #tpu.memory_space<vmem>>, vector<8x8xf32>
    tpu.vector_store %arg7[%c0_89, %c0_90], %243 {strides = array<i32>} : memref<8x8xf32, #tpu.memory_space<vmem>>, vector<8x8xf32>,
    return
  }
  func.func @transform_0(%arg0: i32) -> (i32, i32, i32) {
    %c0_i32 = arith.constant 0 : i32
    %c0_i32_0 = arith.constant 0 : i32
    %c0_i32_1 = arith.constant 0 : i32
    return %c0_i32, %c0_i32_0, %arg0 : i32, i32, i32
  }
  func.func @transform_1(%arg0: i32) -> (i32, i32) {
    %c0_i32 = arith.constant 0 : i32
    %c0_i32_0 = arith.constant 0 : i32
    %c0_i32_1 = arith.constant 0 : i32
    return %c0_i32, %c0_i32_0 : i32, i32
  }
  func.func @transform_2(%arg0: i32) -> (i32, i32) {
    %c0_i32 = arith.constant 0 : i32
    %c0_i32_0 = arith.constant 0 : i32
    %c0_i32_1 = arith.constant 0 : i32
    return %c0_i32, %c0_i32_0 : i32, i32
  }
  func.func @transform_3(%arg0: i32) -> (i32, i32) {
    %c0_i32 = arith.constant 0 : i32
    %c0_i32_0 = arith.constant 0 : i32
    %c0_i32_1 = arith.constant 0 : i32
    return %c0_i32, %c0_i32_0 : i32, i32
  }
  func.func @transform_4(%arg0: i32) -> (i32, i32) {
    %c0_i32 = arith.constant 0 : i32
    %c0_i32_0 = arith.constant 0 : i32
    %c0_i32_1 = arith.constant 0 : i32
    return %c0_i32, %c0_i32_0 : i32, i32
  }
  func.func @transform_5(%arg0: i32) -> (i32, i32) {
    %c0_i32 = arith.constant 0 : i32
    %c0_i32_0 = arith.constant 0 : i32
    %c0_i32_1 = arith.constant 0 : i32
    return %c0_i32, %c0_i32_0 : i32, i32
  }
  func.func @transform_6(%arg0: i32) -> (i32, i32) {
    %c0_i32 = arith.constant 0 : i32
    %c0_i32_0 = arith.constant 0 : i32
    return %c0_i32, %arg0 : i32, i32
  }
}

</mosaic_0001>

<llo_original>
// kernel: tpu_custom_call.1
$region0: #{tpu_custom_call.1}
  #allocation0 [shape = 'u32[]', space=smem, size = 0x4, offset = 0x4, fixed_abs, tag = 'smem constant byte address 0x4 - core index']
  #allocation1 [shape = 'u32[144,128]{1,0:T(1,128)}', space=vmem, size = 0x12000, scoped, tag = 'internal scratch']
  #allocation2 [shape = 'f32[8,32]{1,0:T(8,128)}', space=vmem, size = 0x1000, scoped, tag = 'scratch operand']
  #allocation3 [shape = 'f32[8,32]{1,0:T(8,128)}', space=vmem, size = 0x1000, scoped, tag = 'scratch operand']
  #allocation4 [shape = 'f32[8,8,128]{2,1,0:T(8,128)}', space=vmem, size = 0x8000, scoped, tag = 'scratch operand']
  #allocation5 [shape = 'f32[8,8,32]{2,1,0:T(8,128)}', space=vmem, size = 0x8000, scoped, tag = 'scratch operand']
  #allocation6 [shape = 'f32[1,1]{1,0:T(1,128)S(1)}', space=vmem, size = 0x200, scoped, tag = 'scoped memory for tpu_custom_call.1']
  %s0 = inlined_call_operand.hbm [shape: f32[1,8,8], index: 0, kind: input, shape index: {}]
  %s1 = inlined_call_operand.vmem [shape: f32[1,128], index: 1, kind: input, shape index: {}]
  %s2 = inlined_call_operand.hbm [shape: f32[32,128], index: 2, kind: input, shape index: {}]
  %s3 = inlined_call_operand.vmem [shape: f32[1,128], index: 3, kind: input, shape index: {}]
  %s4 = inlined_call_operand.vmem [shape: f32[1,32], index: 4, kind: input, shape index: {}]
  %s5 = inlined_call_operand.<no memory space> [shape: f32[1,1], index: 5, kind: input, shape index: {}]
  %s6 = inlined_call_operand.hbm [shape: f32[8,8], index: 6, kind: output, shape index: {}]
  %s7 = sld [smem:[#allocation0]]
  $region46: #{tpu_custom_call.1} parent=0
    _
  %s9 = ssub.s32 1, %s7
  %s10 = scalar_select 0, %s9, %s7
  %v11 = vstv %s5
  %12 = vst [vmem:[#allocation6] sm:$0x1] %v11
  $region1: #{tpu_custom_call.1} parent=0
    #allocation7 [shape = 'u8[4096]{0}', space=vmem, size = 0x1000, scoped, tag = 'input window, operand 0, single buffered']
    #allocation8 [shape = 's32[1]{0}', space=sflag, size = 0x4, scoped, tag = 'scoped memory for tpu_custom_call.1']
    #allocation9 [shape = 's32[1]{0}', space=sflag, size = 0x4, scoped, tag = 'scoped memory for tpu_custom_call.1']
    #allocation10 [shape = 'u8[16384]{0}', space=vmem, size = 0x4000, scoped, tag = 'input window, operand 2, single buffered']
    #allocation11 [shape = 's32[1]{0}', space=sflag, size = 0x4, scoped, tag = 'scoped memory for tpu_custom_call.1']
    #allocation12 [shape = 'u8[4096]{0}', space=vmem, size = 0x1000, scoped, tag = 'output window, operand 0, single buffered']
    %13 = vsyncpa [#allocation8], 0
    %14 = vsyncpa [#allocation11], 0
    %15 = vsyncpa [#allocation9], 0
    // Predicated region
    $region2: #{tpu_custom_call.1} parent=1 // pred_check
      _
    $region3: #{tpu_custom_call.1} parent=1 // pred_check_branch
      %17 = sbr.rel (0) target = $region5
    $region4: #{tpu_custom_call.1} parent=1 // pred_region
      %s19 = ssub.s32 128, 128
      %20 = vsyncadd [#allocation8], %s19
      %s22 = sshll.u32 [#allocation7], 4
      %s23 = int_to_ptr.vmem [resolvable:$true] %s22
      %25 = dma.hbm_to_vmem [thread:$0]  %s0, 128, %s23, [#allocation8]
    $region5: #{tpu_custom_call.1} parent=1 // pred_fallthru
      _
    // Predicated region
    $region6: #{tpu_custom_call.1} parent=1 // pred_check
      _
    $region7: #{tpu_custom_call.1} parent=1 // pred_check_branch
      %27 = sbr.rel (0) target = $region9
    $region8: #{tpu_custom_call.1} parent=1 // pred_region
      _
    $region9: #{tpu_custom_call.1} parent=1 // pred_fallthru
      _
    // Predicated region
    $region10: #{tpu_custom_call.1} parent=1 // pred_check
      _
    $region11: #{tpu_custom_call.1} parent=1 // pred_check_branch
      %29 = sbr.rel (0) target = $region13
    $region12: #{tpu_custom_call.1} parent=1 // pred_region
      %s31 = ssub.s32 512, 512
      %32 = vsyncadd [#allocation11], %s31
      %s33 = sshll.u32 [#allocation10], 4
      %s34 = int_to_ptr.vmem [resolvable:$true] %s33
      %39 = dma.hbm_to_vmem [thread:$0]  %s2, 512, %s34, [#allocation11], 128, 128, 8
    $region13: #{tpu_custom_call.1} parent=1 // pred_fallthru
      _
    // Predicated region
    $region14: #{tpu_custom_call.1} parent=1 // pred_check
      _
    $region15: #{tpu_custom_call.1} parent=1 // pred_check_branch
      %41 = sbr.rel (0) target = $region17
    $region16: #{tpu_custom_call.1} parent=1 // pred_region
      _
    $region17: #{tpu_custom_call.1} parent=1 // pred_fallthru
      _
    // Predicated region
    $region18: #{tpu_custom_call.1} parent=1 // pred_check
      _
    $region19: #{tpu_custom_call.1} parent=1 // pred_check_branch
      %43 = sbr.rel (0) target = $region21
    $region20: #{tpu_custom_call.1} parent=1 // pred_region
      _
    $region21: #{tpu_custom_call.1} parent=1 // pred_fallthru
      _
    // Predicated region
    $region22: #{tpu_custom_call.1} parent=1 // pred_check
      _
    $region23: #{tpu_custom_call.1} parent=1 // pred_check_branch
      %45 = sbr.rel (0) target = $region25
    $region24: #{tpu_custom_call.1} parent=1 // pred_region
      _
    $region25: #{tpu_custom_call.1} parent=1 // pred_fallthru
      _
    // Predicated region
    $region26: #{tpu_custom_call.1} parent=1 // pred_check
      _
    $region27: #{tpu_custom_call.1} parent=1 // pred_check_branch
      %47 = sbr.rel (0) target = $region29
    $region28: #{tpu_custom_call.1} parent=1 // pred_region
      %48 = dma.done [#allocation8], 128
    $region29: #{tpu_custom_call.1} parent=1 // pred_fallthru
      _
    // Predicated region
    $region30: #{tpu_custom_call.1} parent=1 // pred_check
      _
    $region31: #{tpu_custom_call.1} parent=1 // pred_check_branch
      %50 = sbr.rel (0) target = $region33
    $region32: #{tpu_custom_call.1} parent=1 // pred_region
      %51 = dma.done [#allocation11], 512
    $region33: #{tpu_custom_call.1} parent=1 // pred_fallthru
      _
    %p52 = scmp.eq.s32.totalorder 0, 0
    // Predicated region
    $region34: #{tpu_custom_call.1} parent=1 // pred_check
      %p53 = pneg %p52
    $region35: #{tpu_custom_call.1} parent=1 // pred_check_branch
      %55 = sbr.rel (%p53) target = $region37
    $region36: #{tpu_custom_call.1} parent=1 // pred_region
      %vm56 = vcmask 261120
      %57 = vst.msk [vmem:[#allocation2] sm:$0xff] %vm56, 0.0
      %58 = vst.msk [vmem:[#allocation3] sm:$0xff] %vm56, 0.0
    $region37: #{tpu_custom_call.1} parent=1 // pred_fallthru
      _
    %v59 = vld [vmem:[%s1] sm:$0x1]
    %v60 = vld [vmem:[%s3] sm:$0x1]
    %v61 = vld [vmem:[#allocation7] sm:$0xff]
    %62 = vxpose.xlu0.b32.start [1/16] %v61, 128
    %63 = vxpose.xlu0.b32.cont [2/16] 0.0, 128
    %64 = vxpose.xlu0.b32.cont [3/16] 0.0, 128
    %65 = vxpose.xlu0.b32.cont [4/16] 0.0, 128
    %66 = vxpose.xlu0.b32.cont [5/16] 0.0, 128
    %67 = vxpose.xlu0.b32.cont [6/16] 0.0, 128
    %68 = vxpose.xlu0.b32.cont [7/16] 0.0, 128
    %69 = vxpose.xlu0.b32.cont [8/16] 0.0, 128
    %70 = vxpose.xlu0.b32.cont [9/16] 0.0, 128
    %71 = vxpose.xlu0.b32.cont [10/16] 0.0, 128
    %72 = vxpose.xlu0.b32.cont [11/16] 0.0, 128
    %73 = vxpose.xlu0.b32.cont [12/16] 0.0, 128
    %74 = vxpose.xlu0.b32.cont [13/16] 0.0, 128
    %75 = vxpose.xlu0.b32.cont [14/16] 0.0, 128
    %76 = vxpose.xlu0.b32.cont [15/16] 0.0, 128
    %77 = vxpose.xlu0.b32.end [16/16] 0.0, 128
    %v78 = vpop.trf.xlu0
    %v79 = vpop.trf.xlu0
    %v80 = vpop.trf.xlu0
    %v81 = vpop.trf.xlu0
    %v82 = vpop.trf.xlu0
    %v83 = vpop.trf.xlu0
    %v84 = vpop.trf.xlu0
    %v85 = vpop.trf.xlu0
    %v86 = vpop.trf.xlu0
    %v87 = vpop.trf.xlu0
    %v88 = vpop.trf.xlu0
    %v89 = vpop.trf.xlu0
    %v90 = vpop.trf.xlu0
    %v91 = vpop.trf.xlu0
    %v92 = vpop.trf.xlu0
    %v93 = vpop.trf.xlu0
    %v94 = vlaneseq
    %v95 = vshrl.u32 %v94, 7
    %v96 = vsub.s32 0, %v95
    %v97 = vrot.slane %v78, %v96
    %99 = vbcast.lane.b32.xlu0 %v97, 256
    %v100 = vpop.permute.xlu0 %99
    %v101 = vlaneseq
    %v102 = vshrl.u32 %v101, 7
    %v103 = vsub.s32 1, %v102
    %v104 = vrot.slane %v78, %v103
    %106 = vbcast.lane.b32.xlu0 %v104, 256
    %v107 = vpop.permute.xlu0 %106
    %v108 = vlaneseq
    %v109 = vshrl.u32 %v108, 7
    %v110 = vsub.s32 2, %v109
    %v111 = vrot.slane %v78, %v110
    %113 = vbcast.lane.b32.xlu0 %v111, 256
    %v114 = vpop.permute.xlu0 %113
    %v115 = vlaneseq
    %v116 = vshrl.u32 %v115, 7
    %v117 = vsub.s32 3, %v116
    %v118 = vrot.slane %v78, %v117
    %120 = vbcast.lane.b32.xlu0 %v118, 256
    %v121 = vpop.permute.xlu0 %120
    %v122 = vlaneseq
    %v123 = vshrl.u32 %v122, 7
    %v124 = vsub.s32 4, %v123
    %v125 = vrot.slane %v78, %v124
    %127 = vbcast.lane.b32.xlu0 %v125, 256
    %v128 = vpop.permute.xlu0 %127
    %v129 = vlaneseq
    %v130 = vshrl.u32 %v129, 7
    %v131 = vsub.s32 5, %v130
    %v132 = vrot.slane %v78, %v131
    %134 = vbcast.lane.b32.xlu0 %v132, 256
    %v135 = vpop.permute.xlu0 %134
    %v136 = vlaneseq
    %v137 = vshrl.u32 %v136, 7
    %v138 = vsub.s32 6, %v137
    %v139 = vrot.slane %v78, %v138
    %141 = vbcast.lane.b32.xlu0 %v139, 256
    %v142 = vpop.permute.xlu0 %141
    %v143 = vlaneseq
    %v144 = vshrl.u32 %v143, 7
    %v145 = vsub.s32 7, %v144
    %v146 = vrot.slane %v78, %v145
    %148 = vbcast.lane.b32.xlu0 %v146, 256
    %v149 = vpop.permute.xlu0 %148
    %v151 = vlaneseq
    %v152 = vshrl.u32 %v151, 7
    %v153 = vsub.s32 0, %v152
    %v154 = vrot.slane %v59, %v153
    %v156 = vmul.f32 %v100, %v154
    %v157 = vmul.f32 %v107, %v154
    %v158 = vmul.f32 %v114, %v154
    %v159 = vmul.f32 %v121, %v154
    %v160 = vmul.f32 %v128, %v154
    %v161 = vmul.f32 %v135, %v154
    %v162 = vmul.f32 %v142, %v154
    %v163 = vmul.f32 %v149, %v154
    %v165 = vlaneseq
    %v166 = vshrl.u32 %v165, 7
    %v167 = vsub.s32 0, %v166
    %v168 = vrot.slane %v60, %v167
    %v170 = vadd.f32 %v156, %v168
    %v171 = vadd.f32 %v157, %v168
    %v172 = vadd.f32 %v158, %v168
    %v173 = vadd.f32 %v159, %v168
    %v174 = vadd.f32 %v160, %v168
    %v175 = vadd.f32 %v161, %v168
    %v176 = vadd.f32 %v162, %v168
    %v177 = vadd.f32 %v163, %v168
    %178 = vst [vmem:[#allocation4] sm:$0xff] %v170
    %179 = vst [vmem:[#allocation4 + $0x8] sm:$0xff] %v171
    %180 = vst [vmem:[#allocation4 + $0x10] sm:$0xff] %v172
    %181 = vst [vmem:[#allocation4 + $0x18] sm:$0xff] %v173
    %182 = vst [vmem:[#allocation4 + $0x20] sm:$0xff] %v174
    %183 = vst [vmem:[#allocation4 + $0x28] sm:$0xff] %v175
    %184 = vst [vmem:[#allocation4 + $0x30] sm:$0xff] %v176
    %185 = vst [vmem:[#allocation4 + $0x38] sm:$0xff] %v177
    %v186 = vld [vmem:[#allocation10] sm:$0xff]
    %v187 = vld [vmem:[#allocation10 + $0x8] sm:$0xff]
    %v188 = vld [vmem:[#allocation10 + $0x10] sm:$0xff]
    %v189 = vld [vmem:[#allocation10 + $0x18] sm:$0xff]
    %v190 = vlaneseq
    %v191 = vand.u32 %v190, 127
    %vm192 = vcmp.ge.s32.totalorder %v191, 64
    %vm193 = vcmp.lt.s32.totalorder %v191, 96
    %vm194 = vmand %vm192, %vm193
    %v195 = vsel %vm194, 1.0, 0.5
    %v196 = vld [vmem:[#allocation2] sm:$0xff]
    %v197 = vld [vmem:[#allocation3] sm:$0xff]
    %v198 = vld [vmem:[#allocation4] sm:$0xff]
    %vm199 = vcmask 261120
    %v201 = vsel %vm199, %v196, 0
    %203 = vmatprep.subr.mxu0 0.0
    %204 = vmatpush1.msra.mxu0 %v186
    %205 = vmatprep.subr.mxu0 0.0
    %206 = vmatpush1.msra.mxu0 %v187
    %207 = vmatprep.subr.mxu0 0.0
    %208 = vmatpush1.msra.mxu0 %v188
    %209 = vmatprep.subr.mxu0 0.0
    %210 = vmatpush1.msra.mxu0 %v189
    %211 = vmatprep.subr.mxu0 0.0
    %212 = vmatpush1.msra.mxu0 0.0
    %213 = vmatprep.subr.mxu0 0.0
    %214 = vmatpush1.msra.mxu0 0.0
    %215 = vmatprep.subr.mxu0 0.0
    %216 = vmatpush1.msra.mxu0 0.0
    %217 = vmatprep.subr.mxu0 0.0
    %218 = vmatpush1.msra.mxu0 0.0
    %219 = vmatprep.subr.mxu0 0.0
    %220 = vmatpush1.msra.mxu0 0.0
    %221 = vmatprep.subr.mxu0 0.0
    %222 = vmatpush1.msra.mxu0 0.0
    %223 = vmatprep.subr.mxu0 0.0
    %224 = vmatpush1.msra.mxu0 0.0
    %225 = vmatprep.subr.mxu0 0.0
    %226 = vmatpush1.msra.mxu0 0.0
    %227 = vmatprep.subr.mxu0 0.0
    %228 = vmatpush1.msra.mxu0 0.0
    %229 = vmatprep.subr.mxu0 0.0
    %230 = vmatpush1.msra.mxu0 0.0
    %231 = vmatprep.subr.mxu0 0.0
    %232 = vmatpush1.msra.mxu0 0.0
    %233 = vmatprep.subr.mxu0 0.0
    %234 = vmatpush1.msra.mxu0 0.0
    %235 = vmatprep.subr.mxu0 0.0
    %236 = vmatpush1.msra.mxu0 0.0
    %237 = vmatprep.subr.mxu0 0.0
    %238 = vmatpush1.msra.mxu0 0.0
    %239 = vmatprep.subr.mxu0 0.0
    %240 = vmatpush1.msra.mxu0 0.0
    %241 = vmatprep.subr.mxu0 0.0
    %242 = vmatpush1.msra.mxu0 0.0
    %243 = vmatprep.subr.mxu0 0.0
    %244 = vmatpush1.msra.mxu0 0.0
    %245 = vmatprep.subr.mxu0 0.0
    %246 = vmatpush1.msra.mxu0 0.0
    %247 = vmatprep.subr.mxu0 0.0
    %248 = vmatpush1.msra.mxu0 0.0
    %249 = vmatprep.subr.mxu0 0.0
    %250 = vmatpush1.msra.mxu0 0.0
    %251 = vmatprep.subr.mxu0 0.0
    %252 = vmatpush1.msra.mxu0 0.0
    %253 = vmatprep.subr.mxu0 0.0
    %254 = vmatpush1.msra.mxu0 0.0
    %255 = vmatprep.subr.mxu0 0.0
    %256 = vmatpush1.msra.mxu0 0.0
    %257 = vmatprep.subr.mxu0 0.0
    %258 = vmatpush1.msra.mxu0 0.0
    %259 = vmatprep.subr.mxu0 0.0
    %260 = vmatpush1.msra.mxu0 0.0
    %261 = vmatprep.subr.mxu0 0.0
    %262 = vmatpush1.msra.mxu0 0.0
    %263 = vmatprep.subr.mxu0 0.0
    %264 = vmatpush1.msra.mxu0 0.0
    %265 = vmatprep.subr.mxu0 0.0
    %266 = vmatpush1.msra.mxu0 0.0
    %267 = vmatprep.mubr.f32.mxu0 0.0
    %268 = vmatmul.mubr.f32.gmra.mrb[0].mxu0 %v201
    %v269 = vpop.f32.mrb[0].mxu0
    %v270 = vadd.f32 0.0, %v269
    %v271 = vpop.f32.mrb[0].mxu0
    %272 = vdwg.mxu0
    %v273 = vadd.f32 %v198, %v270
    %v274 = vmul.f32 %v273, %v195
    %v275 = vtanh.pop %v274
    %v276 = vmul.f32 %v275, 0.5
    %v277 = vadd.f32 %v276, 0.5
    %v278 = vsel %vm194, %v275, %v277
    %280 = vrot.lane.b32.xlu0 %v197, 32
    %v281 = vpop.permute.xlu0 %280
    %v283 = vmul.f32 %v278, %v281
    %285 = vrot.lane.b32.xlu0 %v278, 64
    %v286 = vpop.permute.xlu0 %285
    %v288 = vmul.f32 %v278, %v286
    %290 = vrot.lane.b32.xlu0 %v288, 32
    %v291 = vpop.permute.xlu0 %290
    %v293 = vadd.f32 %v283, %v291
    %v294 = vtanh.pop %v293
    %296 = vrot.lane.b32.xlu0 %v294, 64
    %v297 = vpop.permute.xlu0 %296
    %v299 = vmul.f32 %v278, %v297
    %301 = vrot.lane.b32.xlu0 %v299, 32
    %v302 = vpop.permute.xlu0 %301
    %304 = vst.msk [vmem:[#allocation5] sm:$0xff] %vm199, %v302
    %s305 = scalar_lea.vmem [#allocation4], 8
    %v306 = vld [vmem:[%s305] sm:$0xff]
    %v307 = vsel %vm199, %v302, 0
    %309 = vmatprep.subr.mxu0 0.0
    %310 = vmatpush1.msra.mxu0 %v186
    %311 = vmatprep.subr.mxu0 0.0
    %312 = vmatpush1.msra.mxu0 %v187
    %313 = vmatprep.subr.mxu0 0.0
    %314 = vmatpush1.msra.mxu0 %v188
    %315 = vmatprep.subr.mxu0 0.0
    %316 = vmatpush1.msra.mxu0 %v189
    %317 = vmatprep.subr.mxu0 0.0
    %318 = vmatpush1.msra.mxu0 0.0
    %319 = vmatprep.subr.mxu0 0.0
    %320 = vmatpush1.msra.mxu0 0.0
    %321 = vmatprep.subr.mxu0 0.0
    %322 = vmatpush1.msra.mxu0 0.0
    %323 = vmatprep.subr.mxu0 0.0
    %324 = vmatpush1.msra.mxu0 0.0
    %325 = vmatprep.subr.mxu0 0.0
    %326 = vmatpush1.msra.mxu0 0.0
    %327 = vmatprep.subr.mxu0 0.0
    %328 = vmatpush1.msra.mxu0 0.0
    %329 = vmatprep.subr.mxu0 0.0
    %330 = vmatpush1.msra.mxu0 0.0
    %331 = vmatprep.subr.mxu0 0.0
    %332 = vmatpush1.msra.mxu0 0.0
    %333 = vmatprep.subr.mxu0 0.0
    %334 = vmatpush1.msra.mxu0 0.0
    %335 = vmatprep.subr.mxu0 0.0
    %336 = vmatpush1.msra.mxu0 0.0
    %337 = vmatprep.subr.mxu0 0.0
    %338 = vmatpush1.msra.mxu0 0.0
    %339 = vmatprep.subr.mxu0 0.0
    %340 = vmatpush1.msra.mxu0 0.0
    %341 = vmatprep.subr.mxu0 0.0
    %342 = vmatpush1.msra.mxu0 0.0
    %343 = vmatprep.subr.mxu0 0.0
    %344 = vmatpush1.msra.mxu0 0.0
    %345 = vmatprep.subr.mxu0 0.0
    %346 = vmatpush1.msra.mxu0 0.0
    %347 = vmatprep.subr.mxu0 0.0
    %348 = vmatpush1.msra.mxu0 0.0
    %349 = vmatprep.subr.mxu0 0.0
    %350 = vmatpush1.msra.mxu0 0.0
    %351 = vmatprep.subr.mxu0 0.0
    %352 = vmatpush1.msra.mxu0 0.0
    %353 = vmatprep.subr.mxu0 0.0
    %354 = vmatpush1.msra.mxu0 0.0
    %355 = vmatprep.subr.mxu0 0.0
    %356 = vmatpush1.msra.mxu0 0.0
    %357 = vmatprep.subr.mxu0 0.0
    %358 = vmatpush1.msra.mxu0 0.0
    %359 = vmatprep.subr.mxu0 0.0
    %360 = vmatpush1.msra.mxu0 0.0
    %361 = vmatprep.subr.mxu0 0.0
    %362 = vmatpush1.msra.mxu0 0.0
    %363 = vmatprep.subr.mxu0 0.0
    %364 = vmatpush1.msra.mxu0 0.0
    %365 = vmatprep.subr.mxu0 0.0
    %366 = vmatpush1.msra.mxu0 0.0
    %367 = vmatprep.subr.mxu0 0.0
    %368 = vmatpush1.msra.mxu0 0.0
    %369 = vmatprep.subr.mxu0 0.0
    %370 = vmatpush1.msra.mxu0 0.0
    %371 = vmatprep.subr.mxu0 0.0
    %372 = vmatpush1.msra.mxu0 0.0
    %373 = vmatprep.mubr.f32.mxu0 0.0
    %374 = vmatmul.mubr.f32.gmra.mrb[0].mxu0 %v307
    %v375 = vpop.f32.mrb[0].mxu0
    %v376 = vadd.f32 0.0, %v375
    %v377 = vpop.f32.mrb[0].mxu0
    %378 = vdwg.mxu0
    %v379 = vadd.f32 %v306, %v376
    %v380 = vmul.f32 %v379, %v195
    %v381 = vtanh.pop %v380
    %v382 = vmul.f32 %v381, 0.5
    %v383 = vadd.f32 %v382, 0.5
    %v384 = vsel %vm194, %v381, %v383
    %v385 = vmul.f32 %v384, %v293
    %387 = vrot.lane.b32.xlu0 %v384, 64
    %v388 = vpop.permute.xlu0 %387
    %v390 = vmul.f32 %v384, %v388
    %392 = vrot.lane.b32.xlu0 %v390, 32
    %v393 = vpop.permute.xlu0 %392
    %v395 = vadd.f32 %v385, %v393
    %v396 = vtanh.pop %v395
    %398 = vrot.lane.b32.xlu0 %v396, 64
    %v399 = vpop.permute.xlu0 %398
    %v401 = vmul.f32 %v384, %v399
    %403 = vrot.lane.b32.xlu0 %v401, 32
    %v404 = vpop.permute.xlu0 %403
    %s406 = scalar_lea.vmem [#allocation5], 8
    %407 = vst.msk [vmem:[%s406] sm:$0xff] %vm199, %v404
    %s408 = scalar_lea.vmem [#allocation4], 16
    %v409 = vld [vmem:[%s408] sm:$0xff]
    %v410 = vsel %vm199, %v404, 0
    %412 = vmatprep.subr.mxu0 0.0
    %413 = vmatpush1.msra.mxu0 %v186
    %414 = vmatprep.subr.mxu0 0.0
    %415 = vmatpush1.msra.mxu0 %v187
    %416 = vmatprep.subr.mxu0 0.0
    %417 = vmatpush1.msra.mxu0 %v188
    %418 = vmatprep.subr.mxu0 0.0
    %419 = vmatpush1.msra.mxu0 %v189
    %420 = vmatprep.subr.mxu0 0.0
    %421 = vmatpush1.msra.mxu0 0.0
    %422 = vmatprep.subr.mxu0 0.0
    %423 = vmatpush1.msra.mxu0 0.0
    %424 = vmatprep.subr.mxu0 0.0
    %425 = vmatpush1.msra.mxu0 0.0
    %426 = vmatprep.subr.mxu0 0.0
    %427 = vmatpush1.msra.mxu0 0.0
    %428 = vmatprep.subr.mxu0 0.0
    %429 = vmatpush1.msra.mxu0 0.0
    %430 = vmatprep.subr.mxu0 0.0
    %431 = vmatpush1.msra.mxu0 0.0
    %432 = vmatprep.subr.mxu0 0.0
    %433 = vmatpush1.msra.mxu0 0.0
    %434 = vmatprep.subr.mxu0 0.0
    %435 = vmatpush1.msra.mxu0 0.0
    %436 = vmatprep.subr.mxu0 0.0
    %437 = vmatpush1.msra.mxu0 0.0
    %438 = vmatprep.subr.mxu0 0.0
    %439 = vmatpush1.msra.mxu0 0.0
    %440 = vmatprep.subr.mxu0 0.0
    %441 = vmatpush1.msra.mxu0 0.0
    %442 = vmatprep.subr.mxu0 0.0
    %443 = vmatpush1.msra.mxu0 0.0
    %444 = vmatprep.subr.mxu0 0.0
    %445 = vmatpush1.msra.mxu0 0.0
    %446 = vmatprep.subr.mxu0 0.0
    %447 = vmatpush1.msra.mxu0 0.0
    %448 = vmatprep.subr.mxu0 0.0
    %449 = vmatpush1.msra.mxu0 0.0
    %450 = vmatprep.subr.mxu0 0.0
    %451 = vmatpush1.msra.mxu0 0.0
    %452 = vmatprep.subr.mxu0 0.0
    %453 = vmatpush1.msra.mxu0 0.0
    %454 = vmatprep.subr.mxu0 0.0
    %455 = vmatpush1.msra.mxu0 0.0
    %456 = vmatprep.subr.mxu0 0.0
    %457 = vmatpush1.msra.mxu0 0.0
    %458 = vmatprep.subr.mxu0 0.0
    %459 = vmatpush1.msra.mxu0 0.0
    %460 = vmatprep.subr.mxu0 0.0
    %461 = vmatpush1.msra.mxu0 0.0
    %462 = vmatprep.subr.mxu0 0.0
    %463 = vmatpush1.msra.mxu0 0.0
    %464 = vmatprep.subr.mxu0 0.0
    %465 = vmatpush1.msra.mxu0 0.0
    %466 = vmatprep.subr.mxu0 0.0
    %467 = vmatpush1.msra.mxu0 0.0
    %468 = vmatprep.subr.mxu0 0.0
    %469 = vmatpush1.msra.mxu0 0.0
    %470 = vmatprep.subr.mxu0 0.0
    %471 = vmatpush1.msra.mxu0 0.0
    %472 = vmatprep.subr.mxu0 0.0
    %473 = vmatpush1.msra.mxu0 0.0
    %474 = vmatprep.subr.mxu0 0.0
    %475 = vmatpush1.msra.mxu0 0.0
    %476 = vmatprep.mubr.f32.mxu0 0.0
    %477 = vmatmul.mubr.f32.gmra.mrb[0].mxu0 %v410
    %v478 = vpop.f32.mrb[0].mxu0
    %v479 = vadd.f32 0.0, %v478
    %v480 = vpop.f32.mrb[0].mxu0
    %481 = vdwg.mxu0
    %v482 = vadd.f32 %v409, %v479
    %v483 = vmul.f32 %v482, %v195
    %v484 = vtanh.pop %v483
    %v485 = vmul.f32 %v484, 0.5
    %v486 = vadd.f32 %v485, 0.5
    %v487 = vsel %vm194, %v484, %v486
    %v488 = vmul.f32 %v487, %v395
    %490 = vrot.lane.b32.xlu0 %v487, 64
    %v491 = vpop.permute.xlu0 %490
    %v493 = vmul.f32 %v487, %v491
    %495 = vrot.lane.b32.xlu0 %v493, 32
    %v496 = vpop.permute.xlu0 %495
    %v498 = vadd.f32 %v488, %v496
    %v499 = vtanh.pop %v498
    %501 = vrot.lane.b32.xlu0 %v499, 64
    %v502 = vpop.permute.xlu0 %501
    %v504 = vmul.f32 %v487, %v502
    %506 = vrot.lane.b32.xlu0 %v504, 32
    %v507 = vpop.permute.xlu0 %506
    %s509 = scalar_lea.vmem [#allocation5], 16
    %510 = vst.msk [vmem:[%s509] sm:$0xff] %vm199, %v507
    %s511 = scalar_lea.vmem [#allocation4], 24
    %v512 = vld [vmem:[%s511] sm:$0xff]
    %v513 = vsel %vm199, %v507, 0
    %515 = vmatprep.subr.mxu0 0.0
    %516 = vmatpush1.msra.mxu0 %v186
    %517 = vmatprep.subr.mxu0 0.0
    %518 = vmatpush1.msra.mxu0 %v187
    %519 = vmatprep.subr.mxu0 0.0
    %520 = vmatpush1.msra.mxu0 %v188
    %521 = vmatprep.subr.mxu0 0.0
    %522 = vmatpush1.msra.mxu0 %v189
    %523 = vmatprep.subr.mxu0 0.0
    %524 = vmatpush1.msra.mxu0 0.0
    %525 = vmatprep.subr.mxu0 0.0
    %526 = vmatpush1.msra.mxu0 0.0
    %527 = vmatprep.subr.mxu0 0.0
    %528 = vmatpush1.msra.mxu0 0.0
    %529 = vmatprep.subr.mxu0 0.0
    %530 = vmatpush1.msra.mxu0 0.0
    %531 = vmatprep.subr.mxu0 0.0
    %532 = vmatpush1.msra.mxu0 0.0
    %533 = vmatprep.subr.mxu0 0.0
    %534 = vmatpush1.msra.mxu0 0.0
    %535 = vmatprep.subr.mxu0 0.0
    %536 = vmatpush1.msra.mxu0 0.0
    %537 = vmatprep.subr.mxu0 0.0
    %538 = vmatpush1.msra.mxu0 0.0
    %539 = vmatprep.subr.mxu0 0.0
    %540 = vmatpush1.msra.mxu0 0.0
    %541 = vmatprep.subr.mxu0 0.0
    %542 = vmatpush1.msra.mxu0 0.0
    %543 = vmatprep.subr.mxu0 0.0
    %544 = vmatpush1.msra.mxu0 0.0
    %545 = vmatprep.subr.mxu0 0.0
    %546 = vmatpush1.msra.mxu0 0.0
    %547 = vmatprep.subr.mxu0 0.0
    %548 = vmatpush1.msra.mxu0 0.0
    %549 = vmatprep.subr.mxu0 0.0
    %550 = vmatpush1.msra.mxu0 0.0
    %551 = vmatprep.subr.mxu0 0.0
    %552 = vmatpush1.msra.mxu0 0.0
    %553 = vmatprep.subr.mxu0 0.0
    %554 = vmatpush1.msra.mxu0 0.0
    %555 = vmatprep.subr.mxu0 0.0
    %556 = vmatpush1.msra.mxu0 0.0
    %557 = vmatprep.subr.mxu0 0.0
    %558 = vmatpush1.msra.mxu0 0.0
    %559 = vmatprep.subr.mxu0 0.0
    %560 = vmatpush1.msra.mxu0 0.0
    %561 = vmatprep.subr.mxu0 0.0
    %562 = vmatpush1.msra.mxu0 0.0
    %563 = vmatprep.subr.mxu0 0.0
    %564 = vmatpush1.msra.mxu0 0.0
    %565 = vmatprep.subr.mxu0 0.0
    %566 = vmatpush1.msra.mxu0 0.0
    %567 = vmatprep.subr.mxu0 0.0
    %568 = vmatpush1.msra.mxu0 0.0
    %569 = vmatprep.subr.mxu0 0.0
    %570 = vmatpush1.msra.mxu0 0.0
    %571 = vmatprep.subr.mxu0 0.0
    %572 = vmatpush1.msra.mxu0 0.0
    %573 = vmatprep.subr.mxu0 0.0
    %574 = vmatpush1.msra.mxu0 0.0
    %575 = vmatprep.subr.mxu0 0.0
    %576 = vmatpush1.msra.mxu0 0.0
    %577 = vmatprep.subr.mxu0 0.0
    %578 = vmatpush1.msra.mxu0 0.0
    %579 = vmatprep.mubr.f32.mxu0 0.0
    %580 = vmatmul.mubr.f32.gmra.mrb[0].mxu0 %v513
    %v581 = vpop.f32.mrb[0].mxu0
    %v582 = vadd.f32 0.0, %v581
    %v583 = vpop.f32.mrb[0].mxu0
    %584 = vdwg.mxu0
    %v585 = vadd.f32 %v512, %v582
    %v586 = vmul.f32 %v585, %v195
    %v587 = vtanh.pop %v586
    %v588 = vmul.f32 %v587, 0.5
    %v589 = vadd.f32 %v588, 0.5
    %v590 = vsel %vm194, %v587, %v589
    %v591 = vmul.f32 %v590, %v498
    %593 = vrot.lane.b32.xlu0 %v590, 64
    %v594 = vpop.permute.xlu0 %593
    %v596 = vmul.f32 %v590, %v594
    %598 = vrot.lane.b32.xlu0 %v596, 32
    %v599 = vpop.permute.xlu0 %598
    %v601 = vadd.f32 %v591, %v599
    %v602 = vtanh.pop %v601
    %604 = vrot.lane.b32.xlu0 %v602, 64
    %v605 = vpop.permute.xlu0 %604
    %v607 = vmul.f32 %v590, %v605
    %609 = vrot.lane.b32.xlu0 %v607, 32
    %v610 = vpop.permute.xlu0 %609
    %s612 = scalar_lea.vmem [#allocation5], 24
    %613 = vst.msk [vmem:[%s612] sm:$0xff] %vm199, %v610
    %s614 = scalar_lea.vmem [#allocation4], 32
    %v615 = vld [vmem:[%s614] sm:$0xff]
    %v616 = vsel %vm199, %v610, 0
    %618 = vmatprep.subr.mxu0 0.0
    %619 = vmatpush1.msra.mxu0 %v186
    %620 = vmatprep.subr.mxu0 0.0
    %621 = vmatpush1.msra.mxu0 %v187
    %622 = vmatprep.subr.mxu0 0.0
    %623 = vmatpush1.msra.mxu0 %v188
    %624 = vmatprep.subr.mxu0 0.0
    %625 = vmatpush1.msra.mxu0 %v189
    %626 = vmatprep.subr.mxu0 0.0
    %627 = vmatpush1.msra.mxu0 0.0
    %628 = vmatprep.subr.mxu0 0.0
    %629 = vmatpush1.msra.mxu0 0.0
    %630 = vmatprep.subr.mxu0 0.0
    %631 = vmatpush1.msra.mxu0 0.0
    %632 = vmatprep.subr.mxu0 0.0
    %633 = vmatpush1.msra.mxu0 0.0
    %634 = vmatprep.subr.mxu0 0.0
    %635 = vmatpush1.msra.mxu0 0.0
    %636 = vmatprep.subr.mxu0 0.0
    %637 = vmatpush1.msra.mxu0 0.0
    %638 = vmatprep.subr.mxu0 0.0
    %639 = vmatpush1.msra.mxu0 0.0
    %640 = vmatprep.subr.mxu0 0.0
    %641 = vmatpush1.msra.mxu0 0.0
    %642 = vmatprep.subr.mxu0 0.0
    %643 = vmatpush1.msra.mxu0 0.0
    %644 = vmatprep.subr.mxu0 0.0
    %645 = vmatpush1.msra.mxu0 0.0
    %646 = vmatprep.subr.mxu0 0.0
    %647 = vmatpush1.msra.mxu0 0.0
    %648 = vmatprep.subr.mxu0 0.0
    %649 = vmatpush1.msra.mxu0 0.0
    %650 = vmatprep.subr.mxu0 0.0
    %651 = vmatpush1.msra.mxu0 0.0
    %652 = vmatprep.subr.mxu0 0.0
    %653 = vmatpush1.msra.mxu0 0.0
    %654 = vmatprep.subr.mxu0 0.0
    %655 = vmatpush1.msra.mxu0 0.0
    %656 = vmatprep.subr.mxu0 0.0
    %657 = vmatpush1.msra.mxu0 0.0
    %658 = vmatprep.subr.mxu0 0.0
    %659 = vmatpush1.msra.mxu0 0.0
    %660 = vmatprep.subr.mxu0 0.0
    %661 = vmatpush1.msra.mxu0 0.0
    %662 = vmatprep.subr.mxu0 0.0
    %663 = vmatpush1.msra.mxu0 0.0
    %664 = vmatprep.subr.mxu0 0.0
    %665 = vmatpush1.msra.mxu0 0.0
    %666 = vmatprep.subr.mxu0 0.0
    %667 = vmatpush1.msra.mxu0 0.0
    %668 = vmatprep.subr.mxu0 0.0
    %669 = vmatpush1.msra.mxu0 0.0
    %670 = vmatprep.subr.mxu0 0.0
    %671 = vmatpush1.msra.mxu0 0.0
    %672 = vmatprep.subr.mxu0 0.0
    %673 = vmatpush1.msra.mxu0 0.0
    %674 = vmatprep.subr.mxu0 0.0
    %675 = vmatpush1.msra.mxu0 0.0
    %676 = vmatprep.subr.mxu0 0.0
    %677 = vmatpush1.msra.mxu0 0.0
    %678 = vmatprep.subr.mxu0 0.0
    %679 = vmatpush1.msra.mxu0 0.0
    %680 = vmatprep.subr.mxu0 0.0
    %681 = vmatpush1.msra.mxu0 0.0
    %682 = vmatprep.mubr.f32.mxu0 0.0
    %683 = vmatmul.mubr.f32.gmra.mrb[0].mxu0 %v616
    %v684 = vpop.f32.mrb[0].mxu0
    %v685 = vadd.f32 0.0, %v684
    %v686 = vpop.f32.mrb[0].mxu0
    %687 = vdwg.mxu0
    %v688 = vadd.f32 %v615, %v685
    %v689 = vmul.f32 %v688, %v195
    %v690 = vtanh.pop %v689
    %v691 = vmul.f32 %v690, 0.5
    %v692 = vadd.f32 %v691, 0.5
    %v693 = vsel %vm194, %v690, %v692
    %v694 = vmul.f32 %v693, %v601
    %696 = vrot.lane.b32.xlu0 %v693, 64
    %v697 = vpop.permute.xlu0 %696
    %v699 = vmul.f32 %v693, %v697
    %701 = vrot.lane.b32.xlu0 %v699, 32
    %v702 = vpop.permute.xlu0 %701
    %v704 = vadd.f32 %v694, %v702
    %v705 = vtanh.pop %v704
    %707 = vrot.lane.b32.xlu0 %v705, 64
    %v708 = vpop.permute.xlu0 %707
    %v710 = vmul.f32 %v693, %v708
    %712 = vrot.lane.b32.xlu0 %v710, 32
    %v713 = vpop.permute.xlu0 %712
    %s715 = scalar_lea.vmem [#allocation5], 32
    %716 = vst.msk [vmem:[%s715] sm:$0xff] %vm199, %v713
    %s717 = scalar_lea.vmem [#allocation4], 40
    %v718 = vld [vmem:[%s717] sm:$0xff]
    %v719 = vsel %vm199, %v713, 0
    %721 = vmatprep.subr.mxu0 0.0
    %722 = vmatpush1.msra.mxu0 %v186
    %723 = vmatprep.subr.mxu0 0.0
    %724 = vmatpush1.msra.mxu0 %v187
    %725 = vmatprep.subr.mxu0 0.0
    %726 = vmatpush1.msra.mxu0 %v188
    %727 = vmatprep.subr.mxu0 0.0
    %728 = vmatpush1.msra.mxu0 %v189
    %729 = vmatprep.subr.mxu0 0.0
    %730 = vmatpush1.msra.mxu0 0.0
    %731 = vmatprep.subr.mxu0 0.0
    %732 = vmatpush1.msra.mxu0 0.0
    %733 = vmatprep.subr.mxu0 0.0
    %734 = vmatpush1.msra.mxu0 0.0
    %735 = vmatprep.subr.mxu0 0.0
    %736 = vmatpush1.msra.mxu0 0.0
    %737 = vmatprep.subr.mxu0 0.0
    %738 = vmatpush1.msra.mxu0 0.0
    %739 = vmatprep.subr.mxu0 0.0
    %740 = vmatpush1.msra.mxu0 0.0
    %741 = vmatprep.subr.mxu0 0.0
    %742 = vmatpush1.msra.mxu0 0.0
    %743 = vmatprep.subr.mxu0 0.0
    %744 = vmatpush1.msra.mxu0 0.0
    %745 = vmatprep.subr.mxu0 0.0
    %746 = vmatpush1.msra.mxu0 0.0
    %747 = vmatprep.subr.mxu0 0.0
    %748 = vmatpush1.msra.mxu0 0.0
    %749 = vmatprep.subr.mxu0 0.0
    %750 = vmatpush1.msra.mxu0 0.0
    %751 = vmatprep.subr.mxu0 0.0
    %752 = vmatpush1.msra.mxu0 0.0
    %753 = vmatprep.subr.mxu0 0.0
    %754 = vmatpush1.msra.mxu0 0.0
    %755 = vmatprep.subr.mxu0 0.0
    %756 = vmatpush1.msra.mxu0 0.0
    %757 = vmatprep.subr.mxu0 0.0
    %758 = vmatpush1.msra.mxu0 0.0
    %759 = vmatprep.subr.mxu0 0.0
    %760 = vmatpush1.msra.mxu0 0.0
    %761 = vmatprep.subr.mxu0 0.0
    %762 = vmatpush1.msra.mxu0 0.0
    %763 = vmatprep.subr.mxu0 0.0
    %764 = vmatpush1.msra.mxu0 0.0
    %765 = vmatprep.subr.mxu0 0.0
    %766 = vmatpush1.msra.mxu0 0.0
    %767 = vmatprep.subr.mxu0 0.0
    %768 = vmatpush1.msra.mxu0 0.0
    %769 = vmatprep.subr.mxu0 0.0
    %770 = vmatpush1.msra.mxu0 0.0
    %771 = vmatprep.subr.mxu0 0.0
    %772 = vmatpush1.msra.mxu0 0.0
    %773 = vmatprep.subr.mxu0 0.0
    %774 = vmatpush1.msra.mxu0 0.0
    %775 = vmatprep.subr.mxu0 0.0
    %776 = vmatpush1.msra.mxu0 0.0
    %777 = vmatprep.subr.mxu0 0.0
    %778 = vmatpush1.msra.mxu0 0.0
    %779 = vmatprep.subr.mxu0 0.0
    %780 = vmatpush1.msra.mxu0 0.0
    %781 = vmatprep.subr.mxu0 0.0
    %782 = vmatpush1.msra.mxu0 0.0
    %783 = vmatprep.subr.mxu0 0.0
    %784 = vmatpush1.msra.mxu0 0.0
    %785 = vmatprep.mubr.f32.mxu0 0.0
    %786 = vmatmul.mubr.f32.gmra.mrb[0].mxu0 %v719
    %v787 = vpop.f32.mrb[0].mxu0
    %v788 = vadd.f32 0.0, %v787
    %v789 = vpop.f32.mrb[0].mxu0
    %790 = vdwg.mxu0
    %v791 = vadd.f32 %v718, %v788
    %v792 = vmul.f32 %v791, %v195
    %v793 = vtanh.pop %v792
    %v794 = vmul.f32 %v793, 0.5
    %v795 = vadd.f32 %v794, 0.5
    %v796 = vsel %vm194, %v793, %v795
    %v797 = vmul.f32 %v796, %v704
    %799 = vrot.lane.b32.xlu0 %v796, 64
    %v800 = vpop.permute.xlu0 %799
    %v802 = vmul.f32 %v796, %v800
    %804 = vrot.lane.b32.xlu0 %v802, 32
    %v805 = vpop.permute.xlu0 %804
    %v807 = vadd.f32 %v797, %v805
    %v808 = vtanh.pop %v807
    %810 = vrot.lane.b32.xlu0 %v808, 64
    %v811 = vpop.permute.xlu0 %810
    %v813 = vmul.f32 %v796, %v811
    %815 = vrot.lane.b32.xlu0 %v813, 32
    %v816 = vpop.permute.xlu0 %815
    %s818 = scalar_lea.vmem [#allocation5], 40
    %819 = vst.msk [vmem:[%s818] sm:$0xff] %vm199, %v816
    %s820 = scalar_lea.vmem [#allocation4], 48
    %v821 = vld [vmem:[%s820] sm:$0xff]
    %v822 = vsel %vm199, %v816, 0
    %824 = vmatprep.subr.mxu0 0.0
    %825 = vmatpush1.msra.mxu0 %v186
    %826 = vmatprep.subr.mxu0 0.0
    %827 = vmatpush1.msra.mxu0 %v187
    %828 = vmatprep.subr.mxu0 0.0
    %829 = vmatpush1.msra.mxu0 %v188
    %830 = vmatprep.subr.mxu0 0.0
    %831 = vmatpush1.msra.mxu0 %v189
    %832 = vmatprep.subr.mxu0 0.0
    %833 = vmatpush1.msra.mxu0 0.0
    %834 = vmatprep.subr.mxu0 0.0
    %835 = vmatpush1.msra.mxu0 0.0
    %836 = vmatprep.subr.mxu0 0.0
    %837 = vmatpush1.msra.mxu0 0.0
    %838 = vmatprep.subr.mxu0 0.0
    %839 = vmatpush1.msra.mxu0 0.0
    %840 = vmatprep.subr.mxu0 0.0
    %841 = vmatpush1.msra.mxu0 0.0
    %842 = vmatprep.subr.mxu0 0.0
    %843 = vmatpush1.msra.mxu0 0.0
    %844 = vmatprep.subr.mxu0 0.0
    %845 = vmatpush1.msra.mxu0 0.0
    %846 = vmatprep.subr.mxu0 0.0
    %847 = vmatpush1.msra.mxu0 0.0
    %848 = vmatprep.subr.mxu0 0.0
    %849 = vmatpush1.msra.mxu0 0.0
    %850 = vmatprep.subr.mxu0 0.0
    %851 = vmatpush1.msra.mxu0 0.0
    %852 = vmatprep.subr.mxu0 0.0
    %853 = vmatpush1.msra.mxu0 0.0
    %854 = vmatprep.subr.mxu0 0.0
    %855 = vmatpush1.msra.mxu0 0.0
    %856 = vmatprep.subr.mxu0 0.0
    %857 = vmatpush1.msra.mxu0 0.0
    %858 = vmatprep.subr.mxu0 0.0
    %859 = vmatpush1.msra.mxu0 0.0
    %860 = vmatprep.subr.mxu0 0.0
    %861 = vmatpush1.msra.mxu0 0.0
    %862 = vmatprep.subr.mxu0 0.0
    %863 = vmatpush1.msra.mxu0 0.0
    %864 = vmatprep.subr.mxu0 0.0
    %865 = vmatpush1.msra.mxu0 0.0
    %866 = vmatprep.subr.mxu0 0.0
    %867 = vmatpush1.msra.mxu0 0.0
    %868 = vmatprep.subr.mxu0 0.0
    %869 = vmatpush1.msra.mxu0 0.0
    %870 = vmatprep.subr.mxu0 0.0
    %871 = vmatpush1.msra.mxu0 0.0
    %872 = vmatprep.subr.mxu0 0.0
    %873 = vmatpush1.msra.mxu0 0.0
    %874 = vmatprep.subr.mxu0 0.0
    %875 = vmatpush1.msra.mxu0 0.0
    %876 = vmatprep.subr.mxu0 0.0
    %877 = vmatpush1.msra.mxu0 0.0
    %878 = vmatprep.subr.mxu0 0.0
    %879 = vmatpush1.msra.mxu0 0.0
    %880 = vmatprep.subr.mxu0 0.0
    %881 = vmatpush1.msra.mxu0 0.0
    %882 = vmatprep.subr.mxu0 0.0
    %883 = vmatpush1.msra.mxu0 0.0
    %884 = vmatprep.subr.mxu0 0.0
    %885 = vmatpush1.msra.mxu0 0.0
    %886 = vmatprep.subr.mxu0 0.0
    %887 = vmatpush1.msra.mxu0 0.0
    %888 = vmatprep.mubr.f32.mxu0 0.0
    %889 = vmatmul.mubr.f32.gmra.mrb[0].mxu0 %v822
    %v890 = vpop.f32.mrb[0].mxu0
    %v891 = vadd.f32 0.0, %v890
    %v892 = vpop.f32.mrb[0].mxu0
    %893 = vdwg.mxu0
    %v894 = vadd.f32 %v821, %v891
    %v895 = vmul.f32 %v894, %v195
    %v896 = vtanh.pop %v895
    %v897 = vmul.f32 %v896, 0.5
    %v898 = vadd.f32 %v897, 0.5
    %v899 = vsel %vm194, %v896, %v898
    %v900 = vmul.f32 %v899, %v807
    %902 = vrot.lane.b32.xlu0 %v899, 64
    %v903 = vpop.permute.xlu0 %902
    %v905 = vmul.f32 %v899, %v903
    %907 = vrot.lane.b32.xlu0 %v905, 32
    %v908 = vpop.permute.xlu0 %907
    %v910 = vadd.f32 %v900, %v908
    %v911 = vtanh.pop %v910
    %913 = vrot.lane.b32.xlu0 %v911, 64
    %v914 = vpop.permute.xlu0 %913
    %v916 = vmul.f32 %v899, %v914
    %918 = vrot.lane.b32.xlu0 %v916, 32
    %v919 = vpop.permute.xlu0 %918
    %s921 = scalar_lea.vmem [#allocation5], 48
    %922 = vst.msk [vmem:[%s921] sm:$0xff] %vm199, %v919
    %s923 = scalar_lea.vmem [#allocation4], 56
    %v924 = vld [vmem:[%s923] sm:$0xff]
    %v925 = vsel %vm199, %v919, 0
    %927 = vmatprep.subr.mxu0 0.0
    %928 = vmatpush1.msra.mxu0 %v186
    %929 = vmatprep.subr.mxu0 0.0
    %930 = vmatpush1.msra.mxu0 %v187
    %931 = vmatprep.subr.mxu0 0.0
    %932 = vmatpush1.msra.mxu0 %v188
    %933 = vmatprep.subr.mxu0 0.0
    %934 = vmatpush1.msra.mxu0 %v189
    %935 = vmatprep.subr.mxu0 0.0
    %936 = vmatpush1.msra.mxu0 0.0
    %937 = vmatprep.subr.mxu0 0.0
    %938 = vmatpush1.msra.mxu0 0.0
    %939 = vmatprep.subr.mxu0 0.0
    %940 = vmatpush1.msra.mxu0 0.0
    %941 = vmatprep.subr.mxu0 0.0
    %942 = vmatpush1.msra.mxu0 0.0
    %943 = vmatprep.subr.mxu0 0.0
    %944 = vmatpush1.msra.mxu0 0.0
    %945 = vmatprep.subr.mxu0 0.0
    %946 = vmatpush1.msra.mxu0 0.0
    %947 = vmatprep.subr.mxu0 0.0
    %948 = vmatpush1.msra.mxu0 0.0
    %949 = vmatprep.subr.mxu0 0.0
    %950 = vmatpush1.msra.mxu0 0.0
    %951 = vmatprep.subr.mxu0 0.0
    %952 = vmatpush1.msra.mxu0 0.0
    %953 = vmatprep.subr.mxu0 0.0
    %954 = vmatpush1.msra.mxu0 0.0
    %955 = vmatprep.subr.mxu0 0.0
    %956 = vmatpush1.msra.mxu0 0.0
    %957 = vmatprep.subr.mxu0 0.0
    %958 = vmatpush1.msra.mxu0 0.0
    %959 = vmatprep.subr.mxu0 0.0
    %960 = vmatpush1.msra.mxu0 0.0
    %961 = vmatprep.subr.mxu0 0.0
    %962 = vmatpush1.msra.mxu0 0.0
    %963 = vmatprep.subr.mxu0 0.0
    %964 = vmatpush1.msra.mxu0 0.0
    %965 = vmatprep.subr.mxu0 0.0
    %966 = vmatpush1.msra.mxu0 0.0
    %967 = vmatprep.subr.mxu0 0.0
    %968 = vmatpush1.msra.mxu0 0.0
    %969 = vmatprep.subr.mxu0 0.0
    %970 = vmatpush1.msra.mxu0 0.0
    %971 = vmatprep.subr.mxu0 0.0
    %972 = vmatpush1.msra.mxu0 0.0
    %973 = vmatprep.subr.mxu0 0.0
    %974 = vmatpush1.msra.mxu0 0.0
    %975 = vmatprep.subr.mxu0 0.0
    %976 = vmatpush1.msra.mxu0 0.0
    %977 = vmatprep.subr.mxu0 0.0
    %978 = vmatpush1.msra.mxu0 0.0
    %979 = vmatprep.subr.mxu0 0.0
    %980 = vmatpush1.msra.mxu0 0.0
    %981 = vmatprep.subr.mxu0 0.0
    %982 = vmatpush1.msra.mxu0 0.0
    %983 = vmatprep.subr.mxu0 0.0
    %984 = vmatpush1.msra.mxu0 0.0
    %985 = vmatprep.subr.mxu0 0.0
    %986 = vmatpush1.msra.mxu0 0.0
    %987 = vmatprep.subr.mxu0 0.0
    %988 = vmatpush1.msra.mxu0 0.0
    %989 = vmatprep.subr.mxu0 0.0
    %990 = vmatpush1.msra.mxu0 0.0
    %991 = vmatprep.mubr.f32.mxu0 0.0
    %992 = vmatmul.mubr.f32.gmra.mrb[0].mxu0 %v925
    %v993 = vpop.f32.mrb[0].mxu0
    %v994 = vadd.f32 0.0, %v993
    %v995 = vpop.f32.mrb[0].mxu0
    %996 = vdwg.mxu0
    %v997 = vadd.f32 %v924, %v994
    %v998 = vmul.f32 %v997, %v195
    %v999 = vtanh.pop %v998
    %v1000 = vmul.f32 %v999, 0.5
    %v1001 = vadd.f32 %v1000, 0.5
    %v1002 = vsel %vm194, %v999, %v1001
    %v1003 = vmul.f32 %v1002, %v910
    %1005 = vrot.lane.b32.xlu0 %v1002, 64
    %v1006 = vpop.permute.xlu0 %1005
    %v1008 = vmul.f32 %v1002, %v1006
    %1010 = vrot.lane.b32.xlu0 %v1008, 32
    %v1011 = vpop.permute.xlu0 %1010
    %v1013 = vadd.f32 %v1003, %v1011
    %v1014 = vtanh.pop %v1013
    %1016 = vrot.lane.b32.xlu0 %v1014, 64
    %v1017 = vpop.permute.xlu0 %1016
    %v1019 = vmul.f32 %v1002, %v1017
    %1021 = vrot.lane.b32.xlu0 %v1019, 32
    %v1022 = vpop.permute.xlu0 %1021
    %s1024 = scalar_lea.vmem [#allocation5], 56
    %1025 = vst.msk [vmem:[%s1024] sm:$0xff] %vm199, %v1022
    %1026 = vst.msk [vmem:[#allocation2] sm:$0xff] %vm199, %v1022
    %1028 = vrot.lane.b32.xlu0 %v1013, 96
    %v1029 = vpop.permute.xlu0 %1028
    %1031 = vst.msk [vmem:[#allocation3] sm:$0xff] %vm199, %v1029
    %v1032 = vld [vmem:[#allocation5] sm:$0xff]
    %v1033 = vld [vmem:[#allocation5 + $0x8] sm:$0xff]
    %v1034 = vld [vmem:[#allocation5 + $0x10] sm:$0xff]
    %v1035 = vld [vmem:[#allocation5 + $0x18] sm:$0xff]
    %v1036 = vld [vmem:[#allocation5 + $0x20] sm:$0xff]
    %v1037 = vld [vmem:[#allocation5 + $0x28] sm:$0xff]
    %v1038 = vld [vmem:[#allocation5 + $0x30] sm:$0xff]
    %v1039 = vld [vmem:[#allocation5 + $0x38] sm:$0xff]
    %v1040 = vld [vmem:[%s4] sm:$0x1]
    %v1042 = vlaneseq
    %v1043 = vshrl.u32 %v1042, 7
    %v1044 = vsub.s32 0, %v1043
    %v1045 = vrot.slane %v1040, %v1044
    %v1047 = vmul.f32 %v1032, %v1045
    %v1048 = vmul.f32 %v1033, %v1045
    %v1049 = vmul.f32 %v1034, %v1045
    %v1050 = vmul.f32 %v1035, %v1045
    %v1051 = vmul.f32 %v1036, %v1045
    %v1052 = vmul.f32 %v1037, %v1045
    %v1053 = vmul.f32 %v1038, %v1045
    %v1054 = vmul.f32 %v1039, %v1045
    %v1055 = vsel %vm199, %v1047, 0.0
    %1056 = vadd.xlane.f32.xlu0 %v1055
    %v1057 = vpop.xlane.xlu0 %1056
    %v1058 = vsel %vm199, %v1048, 0.0
    %1059 = vadd.xlane.f32.xlu0 %v1058
    %v1060 = vpop.xlane.xlu0 %1059
    %v1061 = vsel %vm199, %v1049, 0.0
    %1062 = vadd.xlane.f32.xlu0 %v1061
    %v1063 = vpop.xlane.xlu0 %1062
    %v1064 = vsel %vm199, %v1050, 0.0
    %1065 = vadd.xlane.f32.xlu0 %v1064
    %v1066 = vpop.xlane.xlu0 %1065
    %v1067 = vsel %vm199, %v1051, 0.0
    %1068 = vadd.xlane.f32.xlu0 %v1067
    %v1069 = vpop.xlane.xlu0 %1068
    %v1070 = vsel %vm199, %v1052, 0.0
    %1071 = vadd.xlane.f32.xlu0 %v1070
    %v1072 = vpop.xlane.xlu0 %1071
    %v1073 = vsel %vm199, %v1053, 0.0
    %1074 = vadd.xlane.f32.xlu0 %v1073
    %v1075 = vpop.xlane.xlu0 %1074
    %v1076 = vsel %vm199, %v1054, 0.0
    %1077 = vadd.xlane.f32.xlu0 %v1076
    %v1078 = vpop.xlane.xlu0 %1077
    %v1087 = vlaneseq
    %v1088 = vshrl.u32 %v1087, 7
    %v1089 = vsub.s32 %v191, %v1088
    %v1090 = vrot.slane %v1057, %v1089
    %v1091 = vlaneseq
    %v1092 = vshrl.u32 %v1091, 7
    %v1093 = vsub.s32 %v191, %v1092
    %v1094 = vrot.slane %v1060, %v1093
    %v1095 = vlaneseq
    %v1096 = vshrl.u32 %v1095, 7
    %v1097 = vsub.s32 %v191, %v1096
    %v1098 = vrot.slane %v1063, %v1097
    %v1099 = vlaneseq
    %v1100 = vshrl.u32 %v1099, 7
    %v1101 = vsub.s32 %v191, %v1100
    %v1102 = vrot.slane %v1066, %v1101
    %v1103 = vlaneseq
    %v1104 = vshrl.u32 %v1103, 7
    %v1105 = vsub.s32 %v191, %v1104
    %v1106 = vrot.slane %v1069, %v1105
    %v1107 = vlaneseq
    %v1108 = vshrl.u32 %v1107, 7
    %v1109 = vsub.s32 %v191, %v1108
    %v1110 = vrot.slane %v1072, %v1109
    %v1111 = vlaneseq
    %v1112 = vshrl.u32 %v1111, 7
    %v1113 = vsub.s32 %v191, %v1112
    %v1114 = vrot.slane %v1075, %v1113
    %v1115 = vlaneseq
    %v1116 = vshrl.u32 %v1115, 7
    %v1117 = vsub.s32 %v191, %v1116
    %v1118 = vrot.slane %v1078, %v1117
    %vm1119 = vcmask 1041409
    %v1120 = vsel %vm1119, %v1094, %v1090
    %vm1121 = vcmask 1042434
    %v1122 = vsel %vm1121, %v1098, %v1120
    %vm1123 = vcmask 1043459
    %v1124 = vsel %vm1123, %v1102, %v1122
    %vm1125 = vcmask 1044484
    %v1126 = vsel %vm1125, %v1106, %v1124
    %vm1127 = vcmask 1045509
    %v1128 = vsel %vm1127, %v1110, %v1126
    %vm1129 = vcmask 1046534
    %v1130 = vsel %vm1129, %v1114, %v1128
    %vm1131 = vcmask 1047559
    %v1132 = vsel %vm1131, %v1118, %v1130
    %1134 = vxpose.xlu0.b32.start [1/16] %v1132, 128
    %1135 = vxpose.xlu0.b32.cont [2/16] 0.0, 128
    %1136 = vxpose.xlu0.b32.cont [3/16] 0.0, 128
    %1137 = vxpose.xlu0.b32.cont [4/16] 0.0, 128
    %1138 = vxpose.xlu0.b32.cont [5/16] 0.0, 128
    %1139 = vxpose.xlu0.b32.cont [6/16] 0.0, 128
    %1140 = vxpose.xlu0.b32.cont [7/16] 0.0, 128
    %1141 = vxpose.xlu0.b32.cont [8/16] 0.0, 128
    %1142 = vxpose.xlu0.b32.cont [9/16] 0.0, 128
    %1143 = vxpose.xlu0.b32.cont [10/16] 0.0, 128
    %1144 = vxpose.xlu0.b32.cont [11/16] 0.0, 128
    %1145 = vxpose.xlu0.b32.cont [12/16] 0.0, 128
    %1146 = vxpose.xlu0.b32.cont [13/16] 0.0, 128
    %1147 = vxpose.xlu0.b32.cont [14/16] 0.0, 128
    %1148 = vxpose.xlu0.b32.cont [15/16] 0.0, 128
    %1149 = vxpose.xlu0.b32.end [16/16] 0.0, 128
    %v1150 = vpop.trf.xlu0
    %v1151 = vpop.trf.xlu0
    %v1152 = vpop.trf.xlu0
    %v1153 = vpop.trf.xlu0
    %v1154 = vpop.trf.xlu0
    %v1155 = vpop.trf.xlu0
    %v1156 = vpop.trf.xlu0
    %v1157 = vpop.trf.xlu0
    %v1158 = vpop.trf.xlu0
    %v1159 = vpop.trf.xlu0
    %v1160 = vpop.trf.xlu0
    %v1161 = vpop.trf.xlu0
    %v1162 = vpop.trf.xlu0
    %v1163 = vpop.trf.xlu0
    %v1164 = vpop.trf.xlu0
    %v1165 = vpop.trf.xlu0
    %v1166 = vld [vmem:[#allocation6] sm:$0x1]
    %v1168 = vlaneseq
    %v1169 = vshrl.u32 %v1168, 7
    %v1170 = vsub.s32 0, %v1169
    %v1171 = vrot.slane %v1166, %v1170
    %1172 = vset.pattern.permute.xlu0 0
    %1173 = vperm.xlu0 %1172, %v1171
    %v1174 = vpop.permute.xlu0 %1173
    %v1176 = vadd.f32 %v1150, %v1174
    %v1177 = vld [vmem:[#allocation7] sm:$0xff]
    %v1178 = vadd.f32 %v1176, %v1177
    %vm1179 = vcmask 64512
    %1180 = vst.msk [vmem:[#allocation12] sm:$0xff] %vm1179, %v1178
    // Predicated region
    $region38: #{tpu_custom_call.1} parent=1 // pred_check
      _
    $region39: #{tpu_custom_call.1} parent=1 // pred_check_branch
      %1182 = sbr.rel (0) target = $region41
    $region40: #{tpu_custom_call.1} parent=1 // pred_region
      %s1184 = ssub.s32 128, 128
      %1185 = vsyncadd [#allocation9], %s1184
      %s1187 = sshll.u32 [#allocation12], 4
      %s1188 = int_to_ptr.vmem [resolvable:$true] %s1187
      %1190 = dma.vmem_to_hbm [thread:$0]  %s1188, 128, %s6, [#allocation9]
    $region41: #{tpu_custom_call.1} parent=1 // pred_fallthru
      _
    // Predicated region
    $region42: #{tpu_custom_call.1} parent=1 // pred_check
      _
    $region43: #{tpu_custom_call.1} parent=1 // pred_check_branch
      %1192 = sbr.rel (0) target = $region45
    $region44: #{tpu_custom_call.1} parent=1 // pred_region
      %1193 = dma.done [#allocation9], 128
    $region45: #{tpu_custom_call.1} parent=1 // pred_fallthru
      _
    %1194 = vsyncpa [#allocation8], 1
    %1195 = vsyncpa [#allocation11], 1
    %1196 = vsyncpa [#allocation9], 1

</llo_original>
